<compile_context>
chip_gen: v7x
topology: tpu7x:2x2x1
jax: 0.10.0
libtpu: 0.0.40
codegen_flags: <defaults>
</compile_context>

<pallas_src>
import math

import jax
import jax.numpy as jnp
from jax.experimental import pallas as pl
from jax.experimental.pallas import tpu as pltpu

EPS = 1.1920928955078125e-07  # torch.finfo(float32).eps (nn.RMSNorm default eps=None)


def make_block_kernel(T, C, H):
    hs = C // H
    scale = 1.0 / math.sqrt(hs)          # F.scaled_dot_product_attention default scale
    inv_sqrt2 = 1.0 / math.sqrt(2.0)

    def kernel(x_ref, wqkv_ref, bqkv_ref, cos_ref, sin_ref, wproj_ref, bproj_ref,
               w1_ref, b1_ref, w2_ref, b2_ref, o_ref):
        x = x_ref[0]                                            # (T, C) f32

        # ---- RMSNorm 1 (gain g1 folded into the qkv weight rows on the host) ----
        xn = x * jax.lax.rsqrt(jnp.mean(x * x, axis=-1, keepdims=True) + EPS)

        # ---- fused (LoRA-folded) qkv projection, bf16 MXU / f32 accumulate.
        #      The host-prepared weight emits [q, q_roll, k, k_roll, v] (5C cols),
        #      so the RoPE "rotated" copies come straight out of the MXU. ----
        qkv = jnp.dot(xn.astype(jnp.bfloat16), wqkv_ref[...],
                      preferred_element_type=jnp.float32) + bqkv_ref[...]
        q  = qkv[:, 0 * C:1 * C]
        qr = qkv[:, 1 * C:2 * C]
        k  = qkv[:, 2 * C:3 * C]
        kr = qkv[:, 3 * C:4 * C]
        v  = qkv[:, 4 * C:5 * C]

        # ---- RoPE at full (T, C) lane width: one FMA (sign folded into sin) ----
        cos = cos_ref[...]
        sin = sin_ref[...]
        q = q * cos + qr * sin
        k = k * cos + kr * sin

        # ---- head-batched causal attention (leading batch dim = heads) ----
        qh = pltpu.einshape("mhd->hmd", q.astype(jnp.bfloat16).reshape(T, H, hs))
        kh = pltpu.einshape("mhd->hmd", k.astype(jnp.bfloat16).reshape(T, H, hs))
        vh = pltpu.einshape("mhd->hmd", v.astype(jnp.bfloat16).reshape(T, H, hs))

        s = jnp.einsum("hqd,hkd->hqk", qh, kh,
                       preferred_element_type=jnp.float32) * scale       # (H, T, T)
        row = jax.lax.broadcasted_iota(jnp.int32, (T, T), 0)
        col = jax.lax.broadcasted_iota(jnp.int32, (T, T), 1)
        s = jnp.where((row >= col)[None, :, :], s, -jnp.inf)

        # manual softmax: exp on EUP, divide replaced by approx reciprocal (EUP slot)
        m = jnp.max(s, axis=-1, keepdims=True)
        e = jnp.exp(s - m)
        probs = e * pl.reciprocal(jnp.sum(e, axis=-1, keepdims=True), approx=True)

        # NOTE: probs are cast to bf16 for the MXU (f32 accumulation); acceptable at
        #       the 2e-2 tolerance, loses ~3 decimal digits of attention weights at
        #       very large T.
        attn_h = jnp.einsum("hqk,hkd->hqd", probs.astype(jnp.bfloat16), vh,
                            preferred_element_type=jnp.float32)          # (H, T, hs)
        attn = pltpu.einshape("hmd->mhd", attn_h).reshape(T, C)          # token-major

        y = jnp.dot(attn.astype(jnp.bfloat16), wproj_ref[...],
                    preferred_element_type=jnp.float32) + bproj_ref[...]
        x = x + y                                               # dropout_1 = identity (eval)

        # ---- RMSNorm 2 (gain g2 folded into w1 rows) + MLP (Linear -> GELU -> Linear) ----
        xn2 = x * jax.lax.rsqrt(jnp.mean(x * x, axis=-1, keepdims=True) + EPS)
        h1 = jnp.dot(xn2.astype(jnp.bfloat16), w1_ref[...],
                     preferred_element_type=jnp.float32) + b1_ref[...]
        # TODO(synk): exact erf GELU kept for fidelity; on v5e (single f32-only EUP) the
        #             tanh approximation may be preferable if GELU binds the EUP slot.
        h1 = 0.5 * h1 * (1.0 + jax.lax.erf(h1 * inv_sqrt2))
        h2 = jnp.dot(h1.astype(jnp.bfloat16), w2_ref[...],
                     preferred_element_type=jnp.float32) + b2_ref[...]
        o_ref[0] = x + h2                                       # dropout_2 = identity (eval)

    return kernel


def _prep_weights(p, T, C, H):
    """Host-side (exact) folds + RoPE layout permutation + roll-folded columns + bf16 casts."""
    hs = C // H
    half = hs // 2

    # Fold LoRA into the base qkv weight (alpha already folded into Blora by make_params),
    # and the RMSNorm gains into the rows of the following matmul weights
    # (exact: (x_hat*g) @ W == x_hat @ (g[:,None]*W)).
    wqkv = p["wqkv"] + p["A"] @ p["Blora"]
    wqkv = p["g1"].reshape(C, 1) * wqkv
    w1 = p["g2"].reshape(C, 1) * p["w1"]

    # Per-head [evens | odds] column permutation of q/k (per-head dot products are
    # invariant under a shared per-head permutation), plus the per-head half-roll
    # folded into extra output columns so RoPE needs no in-kernel roll.
    local = jnp.concatenate([2 * jnp.arange(half), 2 * jnp.arange(half) + 1])
    perm = (hs * jnp.arange(H)[:, None] + local[None, :]).reshape(-1)            # (C,)
    local_roll = jnp.concatenate([jnp.arange(half, hs), jnp.arange(half)])
    rollp = (hs * jnp.arange(H)[:, None] + local_roll[None, :]).reshape(-1)      # (C,)

    wq = wqkv[:, 0 * C:1 * C][:, perm]
    wk = wqkv[:, 1 * C:2 * C][:, perm]
    wv = wqkv[:, 2 * C:3 * C]
    wqkv5 = jnp.concatenate([wq, wq[:, rollp], wk, wk[:, rollp], wv], axis=1)    # (C, 5C)

    bq = p["bqkv"][:, 0 * C:1 * C][:, perm]
    bk = p["bqkv"][:, 1 * C:2 * C][:, perm]
    bv = p["bqkv"][:, 2 * C:3 * C]
    bqkv5 = jnp.concatenate([bq, bq[:, rollp], bk, bk[:, rollp], bv], axis=1)    # (1, 5C)

    # cos/sin tables in the permuted layout; RoPE sign pattern folded into sin.
    # TODO(synk): for realistic T,C pass these as (T, C/2) / bf16 and/or tile along a
    #             T grid axis to relieve v7x VMEM and HBM traffic.
    cos_full = jnp.repeat(p["cos_half"], 2, axis=1)                              # (T, C)
    sin_full = jnp.repeat(p["sin_half"], 2, axis=1)                              # (T, C)
    sign = jnp.where((jnp.arange(C) % hs) < half, -1.0, 1.0)
    cos_p = cos_full[:, perm]
    sin_p = sin_full[:, perm] * sign[None, :]

    bf = lambda a: a.astype(jnp.bfloat16)
    return [bf(wqkv5), bqkv5, cos_p, sin_p,
            bf(p["wproj"]), p["bproj"],
            bf(w1), p["b1"], bf(p["w2"]), p["b2"]]


def _compiler_params():
    kw = dict(dimension_semantics=("parallel",))
    try:
        cap = int(pltpu.get_tpu_info().vmem_capacity_bytes)
        # ~48 MiB on v7x (64 MiB physical), ~96 MiB on v5e/v6e (128 MiB physical):
        # leaves headroom for compiler-internal scratch / pipeline buffers.
        kw["vmem_limit_bytes"] = (cap * 3) // 4
    except Exception:
        pass  # fall back to the default scoped-VMEM limit
    return pltpu.CompilerParams(**kw)


def block_forward(x, p):
    B, T, C = x.shape
    H = p["num_heads"]
    weights = _prep_weights(p, T, C, H)
    kernel = make_block_kernel(T, C, H)

    in_specs = [pl.BlockSpec((1, T, C), lambda b: (b, 0, 0))]
    for w in weights:
        # Grid-invariant weights/tables: constant index_map + single buffering
        # (default double-buffering would just duplicate them in VMEM).
        in_specs.append(pl.BlockSpec(w.shape, lambda b, nd=w.ndim: (0,) * nd,
                                     pipeline_mode=pl.Buffered(1)))

    return pl.pallas_call(
        kernel,
        out_shape=jax.ShapeDtypeStruct((B, T, C), jnp.float32),
        grid_spec=pltpu.PrefetchScalarGridSpec(
            num_scalar_prefetch=0,
            grid=(B,),
            in_specs=in_specs,
            out_specs=pl.BlockSpec((1, T, C), lambda b: (b, 0, 0)),
        ),
        compiler_params=_compiler_params(),
    )(x, *weights)


def make_params(key, C, H, T, rank=4, alpha=8.0, projection=4):
    """Deterministic synthetic parameters matching the module's shapes.

    g1/g2 and B get non-trivial values (post-training scenario) so the host-side
    folds are exercised numerically; `alpha` is folded into Blora.
    """
    hidden = projection * C
    ks = jax.random.split(key, 12)
    s = 0.02
    p = {"num_heads": H}
    p["g1"] = 1.0 + 0.1 * jax.random.normal(ks[0], (1, C), jnp.float32)
    p["g2"] = 1.0 + 0.1 * jax.random.normal(ks[1], (1, C), jnp.float32)
    p["wqkv"] = s * jax.random.normal(ks[2], (C, 3 * C), jnp.float32)
    p["bqkv"] = s * jax.random.normal(ks[3], (1, 3 * C), jnp.float32)
    p["A"] = jax.random.normal(ks[4], (C, rank), jnp.float32) / jnp.sqrt(float(rank))
    p["Blora"] = alpha * 0.005 * jax.random.normal(ks[5], (rank, 3 * C), jnp.float32)
    p["wproj"] = s * jax.random.normal(ks[6], (C, C), jnp.float32)
    p["bproj"] = s * jax.random.normal(ks[7], (1, C), jnp.float32)
    p["w1"] = s * jax.random.normal(ks[8], (C, hidden), jnp.float32)
    p["b1"] = s * jax.random.normal(ks[9], (1, hidden), jnp.float32)
    p["w2"] = s * jax.random.normal(ks[10], (hidden, C), jnp.float32)
    p["b2"] = s * jax.random.normal(ks[11], (1, C), jnp.float32)
    # RoPE buffers exactly as the module registers them: cos/sin of (T, C//2)
    n_pairs = C // 2
    theta = 10000.0 ** (-2.0 * jnp.arange(n_pairs, dtype=jnp.float32) / C)
    angles = jnp.arange(T, dtype=jnp.float32)[:, None] * theta[None, :]
    p["cos_half"] = jnp.cos(angles)
    p["sin_half"] = jnp.sin(angles)
    return p


def block_ref(x, p):
    """Pure-JAX f32 reference with the module's original (unfolded) math."""
    B, T, C = x.shape
    H = p["num_heads"]
    hs = C // H

    def rms(t, g):
        return t * jax.lax.rsqrt(jnp.mean(t * t, -1, keepdims=True) + EPS) * g

    def rope(t):  # interleaved-pair RoPE, matching the torch module
        tp = t.reshape(B, T, C // 2, 2)
        tr = jnp.stack([-tp[..., 1], tp[..., 0]], axis=-1)
        out = tp * p["cos_half"][None, :, :, None] + tr * p["sin_half"][None, :, :, None]
        return out.reshape(B, T, C)

    xn = rms(x, p["g1"])
    qkv = xn @ p["wqkv"] + p["bqkv"] + (xn @ p["A"]) @ p["Blora"]
    q, k, v = jnp.split(qkv, 3, axis=-1)
    q, k = rope(q), rope(k)
    q = q.reshape(B, T, H, hs).transpose(0, 2, 1, 3)
    k = k.reshape(B, T, H, hs).transpose(0, 2, 1, 3)
    v = v.reshape(B, T, H, hs).transpose(0, 2, 1, 3)
    sc = jnp.einsum("bhqd,bhkd->bhqk", q, k) / jnp.sqrt(float(hs))
    mask = jnp.tril(jnp.ones((T, T), bool))
    sc = jnp.where(mask, sc, -jnp.inf)
    a = jax.nn.softmax(sc, -1)
    o = jnp.einsum("bhqk,bhkd->bhqd", a, v).transpose(0, 2, 1, 3).reshape(B, T, C)
    o = o @ p["wproj"] + p["bproj"]
    x = x + o
    xn2 = rms(x, p["g2"])
    h1 = xn2 @ p["w1"] + p["b1"]
    h1 = 0.5 * h1 * (1.0 + jax.lax.erf(h1 / jnp.sqrt(2.0)))
    return x + h1 @ p["w2"] + p["b2"]


if __name__ == "__main__":
    B, T, C, H = 2, 8, 32, 4            # batch, context_size, embedding_dim, num_heads
    key = jax.random.PRNGKey(0)
    kx, kp = jax.random.split(key)
    x = jax.random.normal(kx, (B, T, C), jnp.float32)
    params = make_params(kp, C, H, T, rank=4, alpha=8.0, projection=4)

    out = jax.block_until_ready(block_forward(x, params))
    ref = jax.block_until_ready(block_ref(x, params))

    assert out.shape == (B, T, C)
    max_err = float(jnp.max(jnp.abs(out - ref)))
    # bf16 matmul inputs (f32 accumulation) + approx reciprocal -> loosened tolerance.
    assert jnp.allclose(out, ref, rtol=2e-2, atol=2e-2), max_err
    print("KERNEL_OK")
</pallas_src>

<mosaic_0001>
module attributes {stable_mosaic.version = 11 : i64} {
  func.func @kernel(%arg0: i32, %arg1: memref<1x8x32xf32, #tpu.memory_space<vmem>>, %arg2: memref<32x160xbf16, #tpu.memory_space<vmem>>, %arg3: memref<1x160xf32, #tpu.memory_space<vmem>>, %arg4: memref<8x32xf32, #tpu.memory_space<vmem>>, %arg5: memref<8x32xf32, #tpu.memory_space<vmem>>, %arg6: memref<32x32xbf16, #tpu.memory_space<vmem>>, %arg7: memref<1x32xf32, #tpu.memory_space<vmem>>, %arg8: memref<32x128xbf16, #tpu.memory_space<vmem>>, %arg9: memref<1x128xf32, #tpu.memory_space<vmem>>, %arg10: memref<128x32xbf16, #tpu.memory_space<vmem>>, %arg11: memref<1x32xf32, #tpu.memory_space<vmem>>, %arg12: memref<1x8x32xf32, #tpu.memory_space<vmem>>) attributes {dimension_semantics = [#tpu.dimension_semantics<parallel>], iteration_bounds = array<i64: 2>, scalar_prefetch = 0 : i64, scratch_operands = 0 : i64, tpu.core_type = #tpu.core_type<tc>, window_params = [{transform_indices = @transform_0, window_bounds = array<i64: 1, 8, 32>}, {pipeline_mode = #tpu.pipeline_mode<synchronous>, transform_indices = @transform_1, window_bounds = array<i64: 32, 160>}, {pipeline_mode = #tpu.pipeline_mode<synchronous>, transform_indices = @transform_2, window_bounds = array<i64: 1, 160>}, {pipeline_mode = #tpu.pipeline_mode<synchronous>, transform_indices = @transform_3, window_bounds = array<i64: 8, 32>}, {pipeline_mode = #tpu.pipeline_mode<synchronous>, transform_indices = @transform_4, window_bounds = array<i64: 8, 32>}, {pipeline_mode = #tpu.pipeline_mode<synchronous>, transform_indices = @transform_5, window_bounds = array<i64: 32, 32>}, {pipeline_mode = #tpu.pipeline_mode<synchronous>, transform_indices = @transform_6, window_bounds = array<i64: 1, 32>}, {pipeline_mode = #tpu.pipeline_mode<synchronous>, transform_indices = @transform_7, window_bounds = array<i64: 32, 128>}, {pipeline_mode = #tpu.pipeline_mode<synchronous>, transform_indices = @transform_8, window_bounds = array<i64: 1, 128>}, {pipeline_mode = #tpu.pipeline_mode<synchronous>, transform_indices = @transform_9, window_bounds = array<i64: 128, 32>}, {pipeline_mode = #tpu.pipeline_mode<synchronous>, transform_indices = @transform_10, window_bounds = array<i64: 1, 32>}, {transform_indices = @transform_11, window_bounds = array<i64: 1, 8, 32>}]} {
    %c0 = arith.constant 0 : index
    %c0_0 = arith.constant 0 : index
    %c0_1 = arith.constant 0 : index
    %0 = vector.load %arg1[%c0, %c0_0, %c0_1] : memref<1x8x32xf32, #tpu.memory_space<vmem>>, vector<1x8x32xf32>
    %1 = vector.shape_cast %0 : vector<1x8x32xf32> to vector<8x32xf32>
    %2 = arith.mulf %1, %1 : vector<8x32xf32>
    %cst = arith.constant dense<0.000000e+00> : vector<8xf32>
    %3 = vector.multi_reduction <add>, %2, %cst [1] : vector<8x32xf32> to vector<8xf32>
    %4 = vector.shape_cast %3 : vector<8xf32> to vector<8x1xf32>
    %cst_2 = arith.constant 3.200000e+01 : f32
    %5 = vector.broadcast %cst_2 : f32 to vector<8x1xf32>
    %6 = arith.divf %4, %5 : vector<8x1xf32>
    %cst_3 = arith.constant 1.1920929E-7 : f32
    %7 = vector.broadcast %cst_3 : f32 to vector<8x1xf32>
    %8 = arith.addf %6, %7 : vector<8x1xf32>
    %9 = math.rsqrt %8 : vector<8x1xf32>
    %10 = vector.broadcast %9 : vector<8x1xf32> to vector<8x32xf32>
    %11 = arith.mulf %1, %10 : vector<8x32xf32>
    %12 = arith.truncf %11 : vector<8x32xf32> to vector<8x32xbf16>
    %c0_4 = arith.constant 0 : index
    %c0_5 = arith.constant 0 : index
    %13 = vector.load %arg2[%c0_4, %c0_5] : memref<32x160xbf16, #tpu.memory_space<vmem>>, vector<32x160xbf16>
    %cst_6 = arith.constant dense<0.000000e+00> : vector<8x160xf32>
    %14 = tpu.matmul %12, %13, %cst_6 {dimension_numbers = #tpu.dot_dimension_numbers<[1], [0], [0], [1], [0, 0, 1, 1], [], []>} : vector<8x32xbf16>, vector<32x160xbf16>, vector<8x160xf32> -> vector<8x160xf32>
    %c0_7 = arith.constant 0 : index
    %c0_8 = arith.constant 0 : index
    %15 = vector.load %arg3[%c0_7, %c0_8] : memref<1x160xf32, #tpu.memory_space<vmem>>, vector<1x160xf32>
    %16 = vector.broadcast %15 : vector<1x160xf32> to vector<8x160xf32>
    %17 = arith.addf %14, %16 : vector<8x160xf32>
    %18 = vector.extract_strided_slice %17 {offsets = [0, 0], sizes = [8, 32], strides = [1, 1]} : vector<8x160xf32> to vector<8x32xf32>
    %19 = vector.extract_strided_slice %17 {offsets = [0, 32], sizes = [8, 32], strides = [1, 1]} : vector<8x160xf32> to vector<8x32xf32>
    %20 = vector.extract_strided_slice %17 {offsets = [0, 64], sizes = [8, 32], strides = [1, 1]} : vector<8x160xf32> to vector<8x32xf32>
    %21 = vector.extract_strided_slice %17 {offsets = [0, 96], sizes = [8, 32], strides = [1, 1]} : vector<8x160xf32> to vector<8x32xf32>
    %22 = vector.extract_strided_slice %17 {offsets = [0, 128], sizes = [8, 32], strides = [1, 1]} : vector<8x160xf32> to vector<8x32xf32>
    %c0_9 = arith.constant 0 : index
    %c0_10 = arith.constant 0 : index
    %23 = vector.load %arg4[%c0_9, %c0_10] : memref<8x32xf32, #tpu.memory_space<vmem>>, vector<8x32xf32>
    %c0_11 = arith.constant 0 : index
    %c0_12 = arith.constant 0 : index
    %24 = vector.load %arg5[%c0_11, %c0_12] : memref<8x32xf32, #tpu.memory_space<vmem>>, vector<8x32xf32>
    %25 = arith.mulf %18, %23 : vector<8x32xf32>
    %26 = arith.mulf %19, %24 : vector<8x32xf32>
    %27 = arith.addf %25, %26 : vector<8x32xf32>
    %28 = arith.mulf %20, %23 : vector<8x32xf32>
    %29 = arith.mulf %21, %24 : vector<8x32xf32>
    %30 = arith.addf %28, %29 : vector<8x32xf32>
    %31 = arith.truncf %27 : vector<8x32xf32> to vector<8x32xbf16>
    %32 = vector.shape_cast %31 : vector<8x32xbf16> to vector<8x4x8xbf16>
    %33 = tpu.transpose %32, [1, 0, 2] : vector<8x4x8xbf16> -> vector<4x8x8xbf16>
    %34 = arith.truncf %30 : vector<8x32xf32> to vector<8x32xbf16>
    %35 = vector.shape_cast %34 : vector<8x32xbf16> to vector<8x4x8xbf16>
    %36 = tpu.transpose %35, [1, 0, 2] : vector<8x4x8xbf16> -> vector<4x8x8xbf16>
    %37 = arith.truncf %22 : vector<8x32xf32> to vector<8x32xbf16>
    %38 = vector.shape_cast %37 : vector<8x32xbf16> to vector<8x4x8xbf16>
    %39 = tpu.transpose %38, [1, 0, 2] : vector<8x4x8xbf16> -> vector<4x8x8xbf16>
    "tpu.trace_start"() <{level = 10 : i32, message = "hqd,hkd->hqk"}> : () -> ()
    %cst_13 = arith.constant dense<0.000000e+00> : vector<4x8x8xf32>
    %40 = tpu.matmul %33, %36, %cst_13 {dimension_numbers = #tpu.dot_dimension_numbers<[2], [2], [1], [1], [0, 0, 0, 1, 1, 1], [0], [0]>} : vector<4x8x8xbf16>, vector<4x8x8xbf16>, vector<4x8x8xf32> -> vector<4x8x8xf32>
    "tpu.trace_stop"() : () -> ()
    %cst_14 = arith.constant 0.353553385 : f32
    %41 = vector.broadcast %cst_14 : f32 to vector<4x8x8xf32>
    %42 = arith.mulf %40, %41 : vector<4x8x8xf32>
    %43 = tpu.iota {dimensions = array<i32: 0>} : vector<8x8xi32>
    %44 = tpu.iota {dimensions = array<i32: 1>} : vector<8x8xi32>
    %45 = arith.cmpi sge, %43, %44 : vector<8x8xi32>
    %46 = vector.shape_cast %45 : vector<8x8xi1> to vector<1x8x8xi1>
    %cst_15 = arith.constant 0xFF800000 : f32
    %47 = vector.shape_cast %46 : vector<1x8x8xi1> to vector<1x8x8xi1>
    %48 = vector.broadcast %47 : vector<1x8x8xi1> to vector<4x8x8xi1>
    %49 = vector.broadcast %cst_15 : f32 to vector<4x8x8xf32>
    %50 = arith.select %48, %42, %49 : vector<4x8x8xi1>, vector<4x8x8xf32>
    %cst_16 = arith.constant dense<0xFF800000> : vector<4x8xf32>
    %51 = vector.multi_reduction <maximumf>, %50, %cst_16 [2] : vector<4x8x8xf32> to vector<4x8xf32>
    %52 = vector.shape_cast %51 : vector<4x8xf32> to vector<4x8x1xf32>
    %53 = vector.broadcast %52 : vector<4x8x1xf32> to vector<4x8x8xf32>
    %54 = arith.subf %50, %53 : vector<4x8x8xf32>
    %55 = math.exp %54 : vector<4x8x8xf32>
    %cst_17 = arith.constant dense<0.000000e+00> : vector<4x8xf32>
    %56 = vector.multi_reduction <add>, %55, %cst_17 [2] : vector<4x8x8xf32> to vector<4x8xf32>
    %57 = vector.shape_cast %56 : vector<4x8xf32> to vector<4x8x1xf32>
    %58 = tpu.reciprocal %57 {approx = true} : vector<4x8x1xf32> -> vector<4x8x1xf32>
    %59 = vector.broadcast %58 : vector<4x8x1xf32> to vector<4x8x8xf32>
    %60 = arith.mulf %55, %59 : vector<4x8x8xf32>
    %61 = arith.truncf %60 : vector<4x8x8xf32> to vector<4x8x8xbf16>
    "tpu.trace_start"() <{level = 10 : i32, message = "hqk,hkd->hqd"}> : () -> ()
    %cst_18 = arith.constant dense<0.000000e+00> : vector<4x8x8xf32>
    %62 = tpu.matmul %61, %39, %cst_18 {dimension_numbers = #tpu.dot_dimension_numbers<[2], [1], [1], [2], [0, 0, 0, 1, 1, 2], [0], [0]>} : vector<4x8x8xbf16>, vector<4x8x8xbf16>, vector<4x8x8xf32> -> vector<4x8x8xf32>
    "tpu.trace_stop"() : () -> ()
    %63 = tpu.transpose %62, [1, 0, 2] : vector<4x8x8xf32> -> vector<8x4x8xf32>
    %64 = vector.shape_cast %63 : vector<8x4x8xf32> to vector<8x32xf32>
    %65 = arith.truncf %64 : vector<8x32xf32> to vector<8x32xbf16>
    %c0_19 = arith.constant 0 : index
    %c0_20 = arith.constant 0 : index
    %66 = vector.load %arg6[%c0_19, %c0_20] : memref<32x32xbf16, #tpu.memory_space<vmem>>, vector<32x32xbf16>
    %cst_21 = arith.constant dense<0.000000e+00> : vector<8x32xf32>
    %67 = tpu.matmul %65, %66, %cst_21 {dimension_numbers = #tpu.dot_dimension_numbers<[1], [0], [0], [1], [0, 0, 1, 1], [], []>} : vector<8x32xbf16>, vector<32x32xbf16>, vector<8x32xf32> -> vector<8x32xf32>
    %c0_22 = arith.constant 0 : index
    %c0_23 = arith.constant 0 : index
    %68 = vector.load %arg7[%c0_22, %c0_23] : memref<1x32xf32, #tpu.memory_space<vmem>>, vector<1x32xf32>
    %69 = vector.broadcast %68 : vector<1x32xf32> to vector<8x32xf32>
    %70 = arith.addf %67, %69 : vector<8x32xf32>
    %71 = arith.addf %1, %70 : vector<8x32xf32>
    %72 = arith.mulf %71, %71 : vector<8x32xf32>
    %cst_24 = arith.constant dense<0.000000e+00> : vector<8xf32>
    %73 = vector.multi_reduction <add>, %72, %cst_24 [1] : vector<8x32xf32> to vector<8xf32>
    %74 = vector.shape_cast %73 : vector<8xf32> to vector<8x1xf32>
    %cst_25 = arith.constant 3.200000e+01 : f32
    %75 = vector.broadcast %cst_25 : f32 to vector<8x1xf32>
    %76 = arith.divf %74, %75 : vector<8x1xf32>
    %cst_26 = arith.constant 1.1920929E-7 : f32
    %77 = vector.broadcast %cst_26 : f32 to vector<8x1xf32>
    %78 = arith.addf %76, %77 : vector<8x1xf32>
    %79 = math.rsqrt %78 : vector<8x1xf32>
    %80 = vector.broadcast %79 : vector<8x1xf32> to vector<8x32xf32>
    %81 = arith.mulf %71, %80 : vector<8x32xf32>
    %82 = arith.truncf %81 : vector<8x32xf32> to vector<8x32xbf16>
    %c0_27 = arith.constant 0 : index
    %c0_28 = arith.constant 0 : index
    %83 = vector.load %arg8[%c0_27, %c0_28] : memref<32x128xbf16, #tpu.memory_space<vmem>>, vector<32x128xbf16>
    %cst_29 = arith.constant dense<0.000000e+00> : vector<8x128xf32>
    %84 = tpu.matmul %82, %83, %cst_29 {dimension_numbers = #tpu.dot_dimension_numbers<[1], [0], [0], [1], [0, 0, 1, 1], [], []>} : vector<8x32xbf16>, vector<32x128xbf16>, vector<8x128xf32> -> vector<8x128xf32>
    %c0_30 = arith.constant 0 : index
    %c0_31 = arith.constant 0 : index
    %85 = vector.load %arg9[%c0_30, %c0_31] : memref<1x128xf32, #tpu.memory_space<vmem>>, vector<1x128xf32>
    %86 = vector.broadcast %85 : vector<1x128xf32> to vector<8x128xf32>
    %87 = arith.addf %84, %86 : vector<8x128xf32>
    %cst_32 = arith.constant 5.000000e-01 : f32
    %88 = vector.broadcast %cst_32 : f32 to vector<8x128xf32>
    %89 = arith.mulf %88, %87 : vector<8x128xf32>
    %cst_33 = arith.constant 0.707106769 : f32
    %90 = vector.broadcast %cst_33 : f32 to vector<8x128xf32>
    %91 = arith.mulf %87, %90 : vector<8x128xf32>
    %92 = math.erf %91 : vector<8x128xf32>
    %cst_34 = arith.constant 1.000000e+00 : f32
    %93 = vector.broadcast %cst_34 : f32 to vector<8x128xf32>
    %94 = arith.addf %93, %92 : vector<8x128xf32>
    %95 = arith.mulf %89, %94 : vector<8x128xf32>
    %96 = arith.truncf %95 : vector<8x128xf32> to vector<8x128xbf16>
    %c0_35 = arith.constant 0 : index
    %c0_36 = arith.constant 0 : index
    %97 = vector.load %arg10[%c0_35, %c0_36] : memref<128x32xbf16, #tpu.memory_space<vmem>>, vector<128x32xbf16>
    %cst_37 = arith.constant dense<0.000000e+00> : vector<8x32xf32>
    %98 = tpu.matmul %96, %97, %cst_37 {dimension_numbers = #tpu.dot_dimension_numbers<[1], [0], [0], [1], [0, 0, 1, 1], [], []>} : vector<8x128xbf16>, vector<128x32xbf16>, vector<8x32xf32> -> vector<8x32xf32>
    %c0_38 = arith.constant 0 : index
    %c0_39 = arith.constant 0 : index
    %99 = vector.load %arg11[%c0_38, %c0_39] : memref<1x32xf32, #tpu.memory_space<vmem>>, vector<1x32xf32>
    %100 = vector.broadcast %99 : vector<1x32xf32> to vector<8x32xf32>
    %101 = arith.addf %98, %100 : vector<8x32xf32>
    %102 = arith.addf %71, %101 : vector<8x32xf32>
    %c0_40 = arith.constant 0 : index
    %c0_41 = arith.constant 0 : index
    %c0_42 = arith.constant 0 : index
    %103 = vector.load %arg12[%c0_40, %c0_41, %c0_42] : memref<1x8x32xf32, #tpu.memory_space<vmem>>, vector<1x8x32xf32>
    %104 = vector.shape_cast %103 : vector<1x8x32xf32> to vector<8x32xf32>
    %105 = vector.shape_cast %102 : vector<8x32xf32> to vector<1x8x32xf32>
    tpu.vector_store %arg12[%c0_40, %c0_41, %c0_42], %105 {strides = array<i32>} : memref<1x8x32xf32, #tpu.memory_space<vmem>>, vector<1x8x32xf32>,
    return
  }
  func.func @transform_0(%arg0: i32) -> (i32, i32, i32) {
    %c0_i32 = arith.constant 0 : i32
    %c0_i32_0 = arith.constant 0 : i32
    %c0_i32_1 = arith.constant 0 : i32
    return %arg0, %c0_i32, %c0_i32_0 : i32, i32, i32
  }
  func.func @transform_1(%arg0: i32) -> (i32, i32) {
    %c0_i32 = arith.constant 0 : i32
    %c0_i32_0 = arith.constant 0 : i32
    %c0_i32_1 = arith.constant 0 : i32
    return %c0_i32, %c0_i32_0 : i32, i32
  }
  func.func @transform_2(%arg0: i32) -> (i32, i32) {
    %c0_i32 = arith.constant 0 : i32
    %c0_i32_0 = arith.constant 0 : i32
    %c0_i32_1 = arith.constant 0 : i32
    return %c0_i32, %c0_i32_0 : i32, i32
  }
  func.func @transform_3(%arg0: i32) -> (i32, i32) {
    %c0_i32 = arith.constant 0 : i32
    %c0_i32_0 = arith.constant 0 : i32
    %c0_i32_1 = arith.constant 0 : i32
    return %c0_i32, %c0_i32_0 : i32, i32
  }
  func.func @transform_4(%arg0: i32) -> (i32, i32) {
    %c0_i32 = arith.constant 0 : i32
    %c0_i32_0 = arith.constant 0 : i32
    %c0_i32_1 = arith.constant 0 : i32
    return %c0_i32, %c0_i32_0 : i32, i32
  }
  func.func @transform_5(%arg0: i32) -> (i32, i32) {
    %c0_i32 = arith.constant 0 : i32
    %c0_i32_0 = arith.constant 0 : i32
    %c0_i32_1 = arith.constant 0 : i32
    return %c0_i32, %c0_i32_0 : i32, i32
  }
  func.func @transform_6(%arg0: i32) -> (i32, i32) {
    %c0_i32 = arith.constant 0 : i32
    %c0_i32_0 = arith.constant 0 : i32
    %c0_i32_1 = arith.constant 0 : i32
    return %c0_i32, %c0_i32_0 : i32, i32
  }
  func.func @transform_7(%arg0: i32) -> (i32, i32) {
    %c0_i32 = arith.constant 0 : i32
    %c0_i32_0 = arith.constant 0 : i32
    %c0_i32_1 = arith.constant 0 : i32
    return %c0_i32, %c0_i32_0 : i32, i32
  }
  func.func @transform_8(%arg0: i32) -> (i32, i32) {
    %c0_i32 = arith.constant 0 : i32
    %c0_i32_0 = arith.constant 0 : i32
    %c0_i32_1 = arith.constant 0 : i32
    return %c0_i32, %c0_i32_0 : i32, i32
  }
  func.func @transform_9(%arg0: i32) -> (i32, i32) {
    %c0_i32 = arith.constant 0 : i32
    %c0_i32_0 = arith.constant 0 : i32
    %c0_i32_1 = arith.constant 0 : i32
    return %c0_i32, %c0_i32_0 : i32, i32
  }
  func.func @transform_10(%arg0: i32) -> (i32, i32) {
    %c0_i32 = arith.constant 0 : i32
    %c0_i32_0 = arith.constant 0 : i32
    %c0_i32_1 = arith.constant 0 : i32
    return %c0_i32, %c0_i32_0 : i32, i32
  }
  func.func @transform_11(%arg0: i32) -> (i32, i32, i32) {
    %c0_i32 = arith.constant 0 : i32
    %c0_i32_0 = arith.constant 0 : i32
    %c0_i32_1 = arith.constant 0 : i32
    return %arg0, %c0_i32, %c0_i32_0 : i32, i32, i32
  }
}

</mosaic_0001>

<llo_original>
// kernel: tpu_custom_call.1
$region0: #{tpu_custom_call.1}
  #allocation0 [shape = 'u32[]', space=smem, size = 0x4, offset = 0x4, fixed_abs, tag = 'smem constant byte address 0x4 - core index']
  #allocation1 [shape = 'u32[144,128]{1,0:T(1,128)}', space=vmem, size = 0x12000, scoped, tag = 'internal scratch']
  %s0 = inlined_call_operand.vmem [shape: f32[2,8,32], index: 0, kind: input, shape index: {}]
  %s1 = inlined_call_operand.vmem [shape: bf16[32,160], index: 1, kind: input, shape index: {}]
  %s2 = inlined_call_operand.vmem [shape: f32[1,160], index: 2, kind: input, shape index: {}]
  %s3 = inlined_call_operand.vmem [shape: f32[8,32], index: 3, kind: input, shape index: {}]
  %s4 = inlined_call_operand.hbm [shape: f32[8,32], index: 4, kind: input, shape index: {}]
  %s5 = inlined_call_operand.vmem [shape: bf16[32,32], index: 5, kind: input, shape index: {}]
  %s6 = inlined_call_operand.vmem [shape: f32[1,32], index: 6, kind: input, shape index: {}]
  %s7 = inlined_call_operand.vmem [shape: bf16[32,128], index: 7, kind: input, shape index: {}]
  %s8 = inlined_call_operand.vmem [shape: f32[1,128], index: 8, kind: input, shape index: {}]
  %s9 = inlined_call_operand.vmem [shape: bf16[128,32], index: 9, kind: input, shape index: {}]
  %s10 = inlined_call_operand.vmem [shape: f32[1,32], index: 10, kind: input, shape index: {}]
  %s11 = inlined_call_operand.hbm [shape: f32[2,8,32], index: 11, kind: output, shape index: {}]
  %s12 = sld [smem:[#allocation0]]
  $region81: #{tpu_custom_call.1} parent=0
    _
  %s14 = ssub.s32 1, %s12
  %s15 = scalar_select 0, %s14, %s12
  $region1: #{tpu_custom_call.1} parent=0
    #allocation2 [shape = 'u8[4096]{0}', space=vmem, size = 0x1000, scoped, tag = 'input window, operand 4, single buffered']
    #allocation3 [shape = 's32[2]{0}', space=sflag, size = 0x8, scoped, tag = 'scoped memory for tpu_custom_call.1']
    #allocation4 [shape = 's32[2]{0}', space=sflag, size = 0x8, scoped, tag = 'scoped memory for tpu_custom_call.1']
    #allocation5 [shape = 'u8[8192]{0}', space=vmem, size = 0x2000, scoped, tag = 'output window, operand 0']
    %16 = vsyncpa [#allocation3], 0
    %17 = vsyncpa [#allocation4], 0
    %s18 = scalar_lea.sflag [#allocation4], 1
    %19 = vsyncpa %s18, 0
    loop: start=0, step=1, limit=4
    $region2: #{tpu_custom_call.1} parent=1 // loop_pre_header
      _
    $region3: #{tpu_custom_call.1} parent=1 // loop_header
      %s21 = sphi 0, %s25
      %p22 = scmp.ge.s32.totalorder %s21, 4
      %s31 = sphi 0, %s33
      %s34 = sphi 0, %s31
      %s35 = sphi 0, %s34
      %s51 = sphi 0, %s35
      %s55 = sphi 0, %s55
      %s57 = sphi 0, %s55
      %s58 = sphi 0, %s57
      %s72 = sphi 0, %s58
      %s76 = sphi 0, %s76
      %s78 = sphi 0, %s76
      %s79 = sphi 0, %s78
      %s93 = sphi 0, %s79
      %s97 = sphi 0, %s97
      %s99 = sphi 0, %s97
      %s100 = sphi 0, %s99
      %s114 = sphi 0, %s100
      %s118 = sphi 0, %s118
      %s120 = sphi 0, %s118
      %s121 = sphi 0, %s120
      %s135 = sphi 0, %s121
      %s139 = sphi 0, %s139
      %s141 = sphi 0, %s139
      %s142 = sphi 0, %s141
      %s156 = sphi 0, %s142
      %s160 = sphi 0, %s160
      %s162 = sphi 0, %s160
      %s163 = sphi 0, %s162
      %s177 = sphi 0, %s163
      %s181 = sphi 0, %s181
      %s183 = sphi 0, %s181
      %s184 = sphi 0, %s183
      %s198 = sphi 0, %s184
      %s202 = sphi 0, %s202
      %s204 = sphi 0, %s202
      %s205 = sphi 0, %s204
      %s219 = sphi 0, %s205
      %s223 = sphi 0, %s223
      %s225 = sphi 0, %s223
      %s226 = sphi 0, %s225
      %s240 = sphi 0, %s226
      %s244 = sphi 0, %s244
      %s246 = sphi 0, %s244
      %s247 = sphi 0, %s246
      %s261 = sphi 0, %s247
      %s267 = sphi 0, %s269
      %s270 = sphi 0, %s267
      %s271 = sphi 0, %s270
      %s287 = sphi 0, %s271
    $region4: #{tpu_custom_call.1} parent=1 // loop_header_branch
      %24 = sbr.rel (%p22) target = $region8
    $region5: #{tpu_custom_call.1} parent=1 // loop_body
      %s26 = ssub.s32 %s21, 1
      %s27 = ssub.s32 %s21, 2
      %s28 = sadd.s32 %s21, 1
      %s29 = ssub.s32 %s21, %s28
      %p30 = scmp.eq.s32.totalorder %s29, 0
      %s32 = sadd.s32 %s31, 1
      %s33 = scalar_select %p30, %s31, %s32
      %p36 = pneg %p30
      %p37 = scmp.eq.s32.totalorder %s21, 1
      %p38 = por %p36, %p37
      %p39 = scmp.ne.s32.totalorder %s31, %s34
      %p40 = scmp.eq.s32.totalorder %s21, 0
      %p41 = por %p39, %p40
      %p42 = scmp.ne.s32.totalorder %s31, %s34
      %p43 = scmp.eq.s32.totalorder %s26, 1
      %p44 = por %p42, %p43
      %p45 = scmp.ne.s32.totalorder %s34, %s35
      %p46 = scmp.eq.s32.totalorder %s26, 0
      %p47 = por %p45, %p46
      %p48 = scmp.ne.s32.totalorder %s34, %s35
      %p49 = scmp.eq.s32.totalorder %s27, 1
      %p50 = por %p48, %p49
      %p52 = scmp.ne.s32.totalorder %s35, %s51
      %p53 = scmp.eq.s32.totalorder %s27, 0
      %p54 = por %p52, %p53
      %s56 = sadd.s32 %s55, 1
      %p59 = scmp.eq.s32.totalorder %s21, 1
      %p60 = scmp.ne.s32.totalorder %s55, %s57
      %p61 = scmp.eq.s32.totalorder %s21, 0
      %p62 = por %p60, %p61
      %p63 = scmp.ne.s32.totalorder %s55, %s57
      %p64 = scmp.eq.s32.totalorder %s26, 1
      %p65 = por %p63, %p64
      %p66 = scmp.ne.s32.totalorder %s57, %s58
      %p67 = scmp.eq.s32.totalorder %s26, 0
      %p68 = por %p66, %p67
      %p69 = scmp.ne.s32.totalorder %s57, %s58
      %p70 = scmp.eq.s32.totalorder %s27, 1
      %p71 = por %p69, %p70
      %p73 = scmp.ne.s32.totalorder %s58, %s72
      %p74 = scmp.eq.s32.totalorder %s27, 0
      %p75 = por %p73, %p74
      %s77 = sadd.s32 %s76, 1
      %p80 = scmp.eq.s32.totalorder %s21, 1
      %p81 = scmp.ne.s32.totalorder %s76, %s78
      %p82 = scmp.eq.s32.totalorder %s21, 0
      %p83 = por %p81, %p82
      %p84 = scmp.ne.s32.totalorder %s76, %s78
      %p85 = scmp.eq.s32.totalorder %s26, 1
      %p86 = por %p84, %p85
      %p87 = scmp.ne.s32.totalorder %s78, %s79
      %p88 = scmp.eq.s32.totalorder %s26, 0
      %p89 = por %p87, %p88
      %p90 = scmp.ne.s32.totalorder %s78, %s79
      %p91 = scmp.eq.s32.totalorder %s27, 1
      %p92 = por %p90, %p91
      %p94 = scmp.ne.s32.totalorder %s79, %s93
      %p95 = scmp.eq.s32.totalorder %s27, 0
      %p96 = por %p94, %p95
      %s98 = sadd.s32 %s97, 1
      %p101 = scmp.eq.s32.totalorder %s21, 1
      %p102 = scmp.ne.s32.totalorder %s97, %s99
      %p103 = scmp.eq.s32.totalorder %s21, 0
      %p104 = por %p102, %p103
      %p105 = scmp.ne.s32.totalorder %s97, %s99
      %p106 = scmp.eq.s32.totalorder %s26, 1
      %p107 = por %p105, %p106
      %p108 = scmp.ne.s32.totalorder %s99, %s100
      %p109 = scmp.eq.s32.totalorder %s26, 0
      %p110 = por %p108, %p109
      %p111 = scmp.ne.s32.totalorder %s99, %s100
      %p112 = scmp.eq.s32.totalorder %s27, 1
      %p113 = por %p111, %p112
      %p115 = scmp.ne.s32.totalorder %s100, %s114
      %p116 = scmp.eq.s32.totalorder %s27, 0
      %p117 = por %p115, %p116
      %s119 = sadd.s32 %s118, 1
      %p122 = scmp.eq.s32.totalorder %s21, 1
      %p123 = scmp.ne.s32.totalorder %s118, %s120
      %p124 = scmp.eq.s32.totalorder %s21, 0
      %p125 = por %p123, %p124
      %p126 = scmp.ne.s32.totalorder %s118, %s120
      %p127 = scmp.eq.s32.totalorder %s26, 1
      %p128 = por %p126, %p127
      %p129 = scmp.ne.s32.totalorder %s120, %s121
      %p130 = scmp.eq.s32.totalorder %s26, 0
      %p131 = por %p129, %p130
      %p132 = scmp.ne.s32.totalorder %s120, %s121
      %p133 = scmp.eq.s32.totalorder %s27, 1
      %p134 = por %p132, %p133
      %p136 = scmp.ne.s32.totalorder %s121, %s135
      %p137 = scmp.eq.s32.totalorder %s27, 0
      %p138 = por %p136, %p137
      %s140 = sadd.s32 %s139, 1
      %p143 = scmp.eq.s32.totalorder %s21, 1
      %p144 = scmp.ne.s32.totalorder %s139, %s141
      %p145 = scmp.eq.s32.totalorder %s21, 0
      %p146 = por %p144, %p145
      %p147 = scmp.ne.s32.totalorder %s139, %s141
      %p148 = scmp.eq.s32.totalorder %s26, 1
      %p149 = por %p147, %p148
      %p150 = scmp.ne.s32.totalorder %s141, %s142
      %p151 = scmp.eq.s32.totalorder %s26, 0
      %p152 = por %p150, %p151
      %p153 = scmp.ne.s32.totalorder %s141, %s142
      %p154 = scmp.eq.s32.totalorder %s27, 1
      %p155 = por %p153, %p154
      %p157 = scmp.ne.s32.totalorder %s142, %s156
      %p158 = scmp.eq.s32.totalorder %s27, 0
      %p159 = por %p157, %p158
      %s161 = sadd.s32 %s160, 1
      %p164 = scmp.eq.s32.totalorder %s21, 1
      %p165 = scmp.ne.s32.totalorder %s160, %s162
      %p166 = scmp.eq.s32.totalorder %s21, 0
      %p167 = por %p165, %p166
      %p168 = scmp.ne.s32.totalorder %s160, %s162
      %p169 = scmp.eq.s32.totalorder %s26, 1
      %p170 = por %p168, %p169
      %p171 = scmp.ne.s32.totalorder %s162, %s163
      %p172 = scmp.eq.s32.totalorder %s26, 0
      %p173 = por %p171, %p172
      %p174 = scmp.ne.s32.totalorder %s162, %s163
      %p175 = scmp.eq.s32.totalorder %s27, 1
      %p176 = por %p174, %p175
      %p178 = scmp.ne.s32.totalorder %s163, %s177
      %p179 = scmp.eq.s32.totalorder %s27, 0
      %p180 = por %p178, %p179
      %s182 = sadd.s32 %s181, 1
      %p185 = scmp.eq.s32.totalorder %s21, 1
      %p186 = scmp.ne.s32.totalorder %s181, %s183
      %p187 = scmp.eq.s32.totalorder %s21, 0
      %p188 = por %p186, %p187
      %p189 = scmp.ne.s32.totalorder %s181, %s183
      %p190 = scmp.eq.s32.totalorder %s26, 1
      %p191 = por %p189, %p190
      %p192 = scmp.ne.s32.totalorder %s183, %s184
      %p193 = scmp.eq.s32.totalorder %s26, 0
      %p194 = por %p192, %p193
      %p195 = scmp.ne.s32.totalorder %s183, %s184
      %p196 = scmp.eq.s32.totalorder %s27, 1
      %p197 = por %p195, %p196
      %p199 = scmp.ne.s32.totalorder %s184, %s198
      %p200 = scmp.eq.s32.totalorder %s27, 0
      %p201 = por %p199, %p200
      %s203 = sadd.s32 %s202, 1
      %p206 = scmp.eq.s32.totalorder %s21, 1
      %p207 = scmp.ne.s32.totalorder %s202, %s204
      %p208 = scmp.eq.s32.totalorder %s21, 0
      %p209 = por %p207, %p208
      %p210 = scmp.ne.s32.totalorder %s202, %s204
      %p211 = scmp.eq.s32.totalorder %s26, 1
      %p212 = por %p210, %p211
      %p213 = scmp.ne.s32.totalorder %s204, %s205
      %p214 = scmp.eq.s32.totalorder %s26, 0
      %p215 = por %p213, %p214
      %p216 = scmp.ne.s32.totalorder %s204, %s205
      %p217 = scmp.eq.s32.totalorder %s27, 1
      %p218 = por %p216, %p217
      %p220 = scmp.ne.s32.totalorder %s205, %s219
      %p221 = scmp.eq.s32.totalorder %s27, 0
      %p222 = por %p220, %p221
      %s224 = sadd.s32 %s223, 1
      %p227 = scmp.eq.s32.totalorder %s21, 1
      %p228 = scmp.ne.s32.totalorder %s223, %s225
      %p229 = scmp.eq.s32.totalorder %s21, 0
      %p230 = por %p228, %p229
      %p231 = scmp.ne.s32.totalorder %s223, %s225
      %p232 = scmp.eq.s32.totalorder %s26, 1
      %p233 = por %p231, %p232
      %p234 = scmp.ne.s32.totalorder %s225, %s226
      %p235 = scmp.eq.s32.totalorder %s26, 0
      %p236 = por %p234, %p235
      %p237 = scmp.ne.s32.totalorder %s225, %s226
      %p238 = scmp.eq.s32.totalorder %s27, 1
      %p239 = por %p237, %p238
      %p241 = scmp.ne.s32.totalorder %s226, %s240
      %p242 = scmp.eq.s32.totalorder %s27, 0
      %p243 = por %p241, %p242
      %s245 = sadd.s32 %s244, 1
      %p248 = scmp.eq.s32.totalorder %s21, 1
      %p249 = scmp.ne.s32.totalorder %s244, %s246
      %p250 = scmp.eq.s32.totalorder %s21, 0
      %p251 = por %p249, %p250
      %p252 = scmp.ne.s32.totalorder %s244, %s246
      %p253 = scmp.eq.s32.totalorder %s26, 1
      %p254 = por %p252, %p253
      %p255 = scmp.ne.s32.totalorder %s246, %s247
      %p256 = scmp.eq.s32.totalorder %s26, 0
      %p257 = por %p255, %p256
      %p258 = scmp.ne.s32.totalorder %s246, %s247
      %p259 = scmp.eq.s32.totalorder %s27, 1
      %p260 = por %p258, %p259
      %p262 = scmp.ne.s32.totalorder %s247, %s261
      %p263 = scmp.eq.s32.totalorder %s27, 0
      %p264 = por %p262, %p263
      %s265 = ssub.s32 %s21, %s28
      %p266 = scmp.eq.s32.totalorder %s265, 0
      %s268 = sadd.s32 %s267, 1
      %s269 = scalar_select %p266, %s267, %s268
      %p272 = pneg %p266
      %p273 = scmp.eq.s32.totalorder %s21, 1
      %p274 = por %p272, %p273
      %p275 = scmp.ne.s32.totalorder %s267, %s270
      %p276 = scmp.eq.s32.totalorder %s21, 0
      %p277 = por %p275, %p276
      %p278 = scmp.ne.s32.totalorder %s267, %s270
      %p279 = scmp.eq.s32.totalorder %s26, 1
      %p280 = por %p278, %p279
      %p281 = scmp.ne.s32.totalorder %s270, %s271
      %p282 = scmp.eq.s32.totalorder %s26, 0
      %p283 = por %p281, %p282
      %p284 = scmp.ne.s32.totalorder %s270, %s271
      %p285 = scmp.eq.s32.totalorder %s27, 1
      %p286 = por %p284, %p285
      %p288 = scmp.ne.s32.totalorder %s271, %s287
      %p289 = scmp.eq.s32.totalorder %s27, 0
      %p290 = por %p288, %p289
      %p291 = scmp.le.s32.totalorder 1, %s21
      %p292 = scmp.lt.s32.totalorder %s21, 3
      %p293 = pnand %p291, %p292
      %p294 = pneg %p293
      // Predicated region
      $region9: #{tpu_custom_call.1} parent=5 // pred_check
        _
      $region10: #{tpu_custom_call.1} parent=5 // pred_check_branch
        %296 = sbr.rel (%p293) target = $region12
      $region11: #{tpu_custom_call.1} parent=5 // pred_region
        %s297 = ssub.s32 %s21, 1
        // Predicated region
        $region13: #{tpu_custom_call.1} parent=11 // pred_check
          %p298 = pneg %p68
        $region14: #{tpu_custom_call.1} parent=11 // pred_check_branch
          %300 = sbr.rel (%p298) target = $region16
        $region15: #{tpu_custom_call.1} parent=11 // pred_region
          _
        $region16: #{tpu_custom_call.1} parent=11 // pred_fallthru
          _
        // Predicated region
        $region17: #{tpu_custom_call.1} parent=11 // pred_check
          %p301 = pneg %p89
        $region18: #{tpu_custom_call.1} parent=11 // pred_check_branch
          %303 = sbr.rel (%p301) target = $region20
        $region19: #{tpu_custom_call.1} parent=11 // pred_region
          _
        $region20: #{tpu_custom_call.1} parent=11 // pred_fallthru
          _
        // Predicated region
        $region21: #{tpu_custom_call.1} parent=11 // pred_check
          %p304 = pneg %p110
        $region22: #{tpu_custom_call.1} parent=11 // pred_check_branch
          %306 = sbr.rel (%p304) target = $region24
        $region23: #{tpu_custom_call.1} parent=11 // pred_region
          _
        $region24: #{tpu_custom_call.1} parent=11 // pred_fallthru
          _
        // Predicated region
        $region25: #{tpu_custom_call.1} parent=11 // pred_check
          %p307 = pneg %p131
        $region26: #{tpu_custom_call.1} parent=11 // pred_check_branch
          %309 = sbr.rel (%p307) target = $region28
        $region27: #{tpu_custom_call.1} parent=11 // pred_region
          %s311 = ssub.s32 128, 128
          %312 = vsyncadd [#allocation3], %s311
          %s314 = sshll.u32 [#allocation2], 4
          %s315 = int_to_ptr.vmem [resolvable:$true] %s314
          %317 = dma.hbm_to_vmem [thread:$0]  %s4, 128, %s315, [#allocation3]
        $region28: #{tpu_custom_call.1} parent=11 // pred_fallthru
          _
        // Predicated region
        $region29: #{tpu_custom_call.1} parent=11 // pred_check
          %p318 = pneg %p152
        $region30: #{tpu_custom_call.1} parent=11 // pred_check_branch
          %320 = sbr.rel (%p318) target = $region32
        $region31: #{tpu_custom_call.1} parent=11 // pred_region
          _
        $region32: #{tpu_custom_call.1} parent=11 // pred_fallthru
          _
        // Predicated region
        $region33: #{tpu_custom_call.1} parent=11 // pred_check
          %p321 = pneg %p173
        $region34: #{tpu_custom_call.1} parent=11 // pred_check_branch
          %323 = sbr.rel (%p321) target = $region36
        $region35: #{tpu_custom_call.1} parent=11 // pred_region
          _
        $region36: #{tpu_custom_call.1} parent=11 // pred_fallthru
          _
        // Predicated region
        $region37: #{tpu_custom_call.1} parent=11 // pred_check
          %p324 = pneg %p194
        $region38: #{tpu_custom_call.1} parent=11 // pred_check_branch
          %326 = sbr.rel (%p324) target = $region40
        $region39: #{tpu_custom_call.1} parent=11 // pred_region
          _
        $region40: #{tpu_custom_call.1} parent=11 // pred_fallthru
          _
        // Predicated region
        $region41: #{tpu_custom_call.1} parent=11 // pred_check
          %p327 = pneg %p215
        $region42: #{tpu_custom_call.1} parent=11 // pred_check_branch
          %329 = sbr.rel (%p327) target = $region44
        $region43: #{tpu_custom_call.1} parent=11 // pred_region
          _
        $region44: #{tpu_custom_call.1} parent=11 // pred_fallthru
          _
        // Predicated region
        $region45: #{tpu_custom_call.1} parent=11 // pred_check
          %p330 = pneg %p236
        $region46: #{tpu_custom_call.1} parent=11 // pred_check_branch
          %332 = sbr.rel (%p330) target = $region48
        $region47: #{tpu_custom_call.1} parent=11 // pred_region
          _
        $region48: #{tpu_custom_call.1} parent=11 // pred_fallthru
          _
        // Predicated region
        $region49: #{tpu_custom_call.1} parent=11 // pred_check
          %p333 = pneg %p257
        $region50: #{tpu_custom_call.1} parent=11 // pred_check_branch
          %335 = sbr.rel (%p333) target = $region52
        $region51: #{tpu_custom_call.1} parent=11 // pred_region
          _
        $region52: #{tpu_custom_call.1} parent=11 // pred_fallthru
          _
      $region12: #{tpu_custom_call.1} parent=5 // pred_fallthru
        _
      %p336 = scmp.lt.s32.totalorder %s21, 2
      // Predicated region
      $region53: #{tpu_custom_call.1} parent=5 // pred_check
        %p337 = pneg %p336
      $region54: #{tpu_custom_call.1} parent=5 // pred_check_branch
        %339 = sbr.rel (%p337) target = $region56
      $region55: #{tpu_custom_call.1} parent=5 // pred_region
        // Predicated region
        $region57: #{tpu_custom_call.1} parent=55 // pred_check
          %p340 = pneg %p41
        $region58: #{tpu_custom_call.1} parent=55 // pred_check_branch
          %342 = sbr.rel (%p340) target = $region60
        $region59: #{tpu_custom_call.1} parent=55 // pred_region
          %p343 = scmp.lt.s32.totalorder %s21, 1
          %s344 = scalar_select %p343, %s21, 1
          %s345 = smul.addr %s344, 8
          %s346 = scalar_lea.vmem %s0, %s345
        $region60: #{tpu_custom_call.1} parent=55 // pred_fallthru
          _
      $region56: #{tpu_custom_call.1} parent=5 // pred_fallthru
        _
      %p347 = scmp.le.s32.totalorder 1, %s21
      %p348 = scmp.lt.s32.totalorder %s21, 3
      %p349 = pnand %p347, %p348
      %p350 = pneg %p349
      // Predicated region
      $region61: #{tpu_custom_call.1} parent=5 // pred_check
        _
      $region62: #{tpu_custom_call.1} parent=5 // pred_check_branch
        %352 = sbr.rel (%p349) target = $region64
      $region63: #{tpu_custom_call.1} parent=5 // pred_region
        %s353 = ssub.s32 %s21, 1
        // Predicated region
        $region65: #{tpu_custom_call.1} parent=63 // pred_check
          %p354 = pneg %p131
        $region66: #{tpu_custom_call.1} parent=63 // pred_check_branch
          %356 = sbr.rel (%p354) target = $region68
        $region67: #{tpu_custom_call.1} parent=63 // pred_region
          %357 = dma.done [#allocation3], 128
        $region68: #{tpu_custom_call.1} parent=63 // pred_fallthru
          _
        %p358 = scmp.lt.s32.totalorder %s26, 1
        %s359 = scalar_select %p358, %s26, 1
        %s360 = smul.addr %s359, 8
        %s361 = scalar_lea.vmem %s0, %s360
        %p362 = pneg %p47
        %p363 = pneg %p44
        %p364 = pneg %p68
        %p365 = pneg %p65
        %p366 = pneg %p89
        %p367 = pneg %p86
        %p368 = pneg %p110
        %p369 = pneg %p107
        %p370 = pneg %p131
        %p371 = pneg %p128
        %p372 = pneg %p152
        %p373 = pneg %p149
        %p374 = pneg %p173
        %p375 = pneg %p170
        %p376 = pneg %p194
        %p377 = pneg %p191
        %p378 = pneg %p215
        %p379 = pneg %p212
        %p380 = pneg %p236
        %p381 = pneg %p233
        %p382 = pneg %p257
        %p383 = pneg %p254
        %p384 = pneg %p283
        %p385 = pneg %p280
        %s386 = sand.u32 %s270, 1
        %s387 = scalar_lea.sflag [#allocation4], %s386
        %s388 = sand.u32 %s270, 1
        %s389 = smul.addr %s388, 8
        %s390 = scalar_lea.vmem [#allocation5], %s389
        %p391 = scmp.lt.s32.totalorder %s26, 1
        %s392 = scalar_select %p391, %s26, 1
        %s393 = smul.addr %s392, 8
        %s394 = scalar_lea.vmem %s0, %s393
        %v396 = vld [vmem:[%s394] sm:$0xff]
        %v397 = vmul.f32 %v396, %v396
        %vm398 = vcmask 261120
        %v399 = vsel %vm398, %v397, 0.0
        %400 = vadd.xlane.f32.xlu0 %v399
        %v401 = vpop.xlane.xlu0 %400
        %v402 = vrcp.pop 32.0
        %v403 = vmul.f32 %v401, %v402
        %v404 = vadd.f32 %v403, 1.1920929e-07
        %v405 = vrsqrt.pop %v404
        %v406 = vmul.f32 %v396, %v405
        %v407 = vpack.c.bf16 %v406, %v406
        %v408 = vld [vmem:[%s1] sm:$0xff]
        %v409 = vld [vmem:[%s1 + $0x8] sm:$0xff]
        %v410 = vld [vmem:[%s1 + $0x10] sm:$0xff]
        %v411 = vld [vmem:[%s1 + $0x18] sm:$0xff]
        %v412 = vld [vmem:[%s2] sm:$0x3]
        %v414 = vlaneseq
        %v415 = vshrl.u32 %v414, 7
        %v416 = vsub.s32 0, %v415
        %v417 = vrot.slane %v412, %v416
        %v418 = vlaneseq
        %v419 = vshrl.u32 %v418, 7
        %v420 = vsub.s32 1, %v419
        %v421 = vrot.slane %v412, %v420
        %v428 = vunpack.c.l.b16 %v408
        %v429 = vunpack.c.h.b16 %v408
        %v430 = vunpack.c.l.b16 %v409
        %v431 = vunpack.c.h.b16 %v409
        %v432 = vunpack.c.l.b16 %v410
        %v433 = vunpack.c.h.b16 %v410
        %v434 = vunpack.c.l.b16 %v411
        %v435 = vunpack.c.h.b16 %v411
        %v436 = vpack.c.b16 %v430, %v428
        %v437 = vpack.c.b16 %v431, %v429
        %v438 = vpack.c.b16 %v434, %v432
        %v439 = vpack.c.b16 %v435, %v433
        %v445 = vsel %vm398, %v407, 0
        %447 = vmatprep.subr.bf16.mxu0 %v437
        %448 = vmatpush1.bf16.msra.mxu0 %v436
        %449 = vmatprep.subr.bf16.mxu0 %v439
        %450 = vmatpush1.bf16.msra.mxu0 %v438
        %451 = vmatprep.subr.bf16.mxu0 0
        %452 = vmatpush1.bf16.msra.mxu0 0
        %453 = vmatprep.subr.bf16.mxu0 0
        %454 = vmatpush1.bf16.msra.mxu0 0
        %455 = vmatprep.subr.bf16.mxu0 0
        %456 = vmatpush1.bf16.msra.mxu0 0
        %457 = vmatprep.subr.bf16.mxu0 0
        %458 = vmatpush1.bf16.msra.mxu0 0
        %459 = vmatprep.subr.bf16.mxu0 0
        %460 = vmatpush1.bf16.msra.mxu0 0
        %461 = vmatprep.subr.bf16.mxu0 0
        %462 = vmatpush1.bf16.msra.mxu0 0
        %463 = vmatprep.subr.bf16.mxu0 0
        %464 = vmatpush1.bf16.msra.mxu0 0
        %465 = vmatprep.subr.bf16.mxu0 0
        %466 = vmatpush1.bf16.msra.mxu0 0
        %467 = vmatprep.subr.bf16.mxu0 0
        %468 = vmatpush1.bf16.msra.mxu0 0
        %469 = vmatprep.subr.bf16.mxu0 0
        %470 = vmatpush1.bf16.msra.mxu0 0
        %471 = vmatprep.subr.bf16.mxu0 0
        %472 = vmatpush1.bf16.msra.mxu0 0
        %473 = vmatprep.subr.bf16.mxu0 0
        %474 = vmatpush1.bf16.msra.mxu0 0
        %475 = vmatprep.subr.bf16.mxu0 0
        %476 = vmatpush1.bf16.msra.mxu0 0
        %477 = vmatprep.subr.bf16.mxu0 0
        %478 = vmatpush1.bf16.msra.mxu0 0
        %479 = vmatprep.mubr.bf16.mxu0 0
        %480 = vmatmul.mubr.bf16.gmra.mrb[0].mxu0 %v445
        %v481 = vpop.f32.mrb[0].mxu0
        %v482 = vadd.f32 %v417, %v481
        %v483 = vpop.f32.mrb[0].mxu0
        %v484 = vadd.f32 %v421, %v483
        %v485 = vpop.f32.mrb[0].mxu0
        %v486 = vpop.f32.mrb[0].mxu0
        %487 = vdwg.mxu0
        %v488 = vld [vmem:[%s3] sm:$0xff]
        %v489 = vld [vmem:[#allocation2] sm:$0xff]
        %v490 = vmul.f32 %v482, %v488
        %492 = vrot.lane.b32.xlu0 %v489, 32
        %v493 = vpop.permute.xlu0 %492
        %v495 = vmul.f32 %v482, %v493
        %497 = vrot.lane.b32.xlu0 %v495, 96
        %v498 = vpop.permute.xlu0 %497
        %v500 = vadd.f32 %v490, %v498
        %502 = vrot.lane.b32.xlu0 %v488, 64
        %v503 = vpop.permute.xlu0 %502
        %v505 = vmul.f32 %v482, %v503
        %506 = vrot.lane.b32.xlu0 %v489, 96
        %v507 = vpop.permute.xlu0 %506
        %v509 = vmul.f32 %v482, %v507
        %511 = vrot.lane.b32.xlu0 %v509, 96
        %v512 = vpop.permute.xlu0 %511
        %v514 = vadd.f32 %v505, %v512
        %v515 = vpack.c.bf16 %v500, %v500
        %517 = vrot.lane.b32.xlu0 %v515, 120
        %v518 = vpop.permute.xlu0 %517
        %519 = vrot.lane.b32.xlu0 %v515, 112
        %v520 = vpop.permute.xlu0 %519
        %521 = vrot.lane.b32.xlu0 %v515, 104
        %v522 = vpop.permute.xlu0 %521
        %v524 = vunpack.c.l.s4 1983009808
        %v525 = vunpack.c.0.s8 %v524
        %v526 = vlaneseq
        %v527 = vshrl.u32 %v526, 7
        %v528 = vsub.s32 %v525, %v527
        %v529 = vrot.slane %v515, %v528
        %v532 = vunpack.c.l.s4 1983009808
        %v533 = vunpack.c.0.s8 %v532
        %v534 = vlaneseq
        %v535 = vshrl.u32 %v534, 7
        %v536 = vsub.s32 %v533, %v535
        %v537 = vrot.slane %v520, %v536
        %v538 = vcombine.low %v529, %v537
        %v539 = vcombine.high %v529, %v537
        %v541 = vunpack.c.l.s4 1934713408
        %v542 = vunpack.c.0.s8 %v541
        %v543 = vlaneseq
        %v544 = vshrl.u32 %v543, 7
        %v545 = vsub.s32 %v542, %v544
        %v546 = vrot.slane %v538, %v545
        %v548 = vunpack.c.l.s4 1934713408
        %v549 = vunpack.c.0.s8 %v548
        %v550 = vlaneseq
        %v551 = vshrl.u32 %v550, 7
        %v552 = vsub.s32 %v549, %v551
        %v553 = vrot.slane %v539, %v552
        %v554 = vcombine.high %v546, 0
        %v555 = vcombine.high %v553, 0
        %v558 = vunpack.c.l.s4 1983009808
        %v559 = vunpack.c.0.s8 %v558
        %v560 = vlaneseq
        %v561 = vshrl.u32 %v560, 7
        %v562 = vsub.s32 %v559, %v561
        %v563 = vrot.slane %v518, %v562
        %v566 = vunpack.c.l.s4 1983009808
        %v567 = vunpack.c.0.s8 %v566
        %v568 = vlaneseq
        %v569 = vshrl.u32 %v568, 7
        %v570 = vsub.s32 %v567, %v569
        %v571 = vrot.slane %v522, %v570
        %v572 = vcombine.low %v563, %v571
        %v573 = vcombine.high %v563, %v571
        %v575 = vunpack.c.l.s4 1934713408
        %v576 = vunpack.c.0.s8 %v575
        %v577 = vlaneseq
        %v578 = vshrl.u32 %v577, 7
        %v579 = vsub.s32 %v576, %v578
        %v580 = vrot.slane %v572, %v579
        %v582 = vunpack.c.l.s4 1934713408
        %v583 = vunpack.c.0.s8 %v582
        %v584 = vlaneseq
        %v585 = vshrl.u32 %v584, 7
        %v586 = vsub.s32 %v583, %v585
        %v587 = vrot.slane %v573, %v586
        %v588 = vcombine.high %v580, 0
        %v589 = vcombine.high %v587, 0
        %v592 = vpack.i.b16 %v580, %v546
        %v594 = vshrl.u32 %v546, 16
        %v595 = vshrl.u32 %v580, 16
        %v596 = vpack.i.b16 %v595, %v594
        %v600 = vpack.i.b16 %v588, %v554
        %v602 = vshrl.u32 %v554, 16
        %v603 = vshrl.u32 %v588, 16
        %v604 = vpack.i.b16 %v603, %v602
        %v608 = vpack.i.b16 %v587, %v553
        %v610 = vshrl.u32 %v553, 16
        %v611 = vshrl.u32 %v587, 16
        %v612 = vpack.i.b16 %v611, %v610
        %v616 = vpack.i.b16 %v589, %v555
        %v618 = vshrl.u32 %v555, 16
        %v619 = vshrl.u32 %v589, 16
        %v620 = vpack.i.b16 %v619, %v618
        %v622 = vcombine.low %v592, %v608
        %v624 = vunpack.c.l.s4 1983009808
        %v625 = vunpack.c.0.s8 %v624
        %v626 = vlaneseq
        %v627 = vshrl.u32 %v626, 7
        %v628 = vsub.s32 %v625, %v627
        %v629 = vrot.slane %v622, %v628
        %v630 = vcombine.low %v600, %v616
        %v632 = vunpack.c.l.s4 1983009808
        %v633 = vunpack.c.0.s8 %v632
        %v634 = vlaneseq
        %v635 = vshrl.u32 %v634, 7
        %v636 = vsub.s32 %v633, %v635
        %v637 = vrot.slane %v630, %v636
        %v638 = vcombine.low %v629, %v637
        %v640 = vunpack.c.l.s4 1934713408
        %v641 = vunpack.c.0.s8 %v640
        %v642 = vlaneseq
        %v643 = vshrl.u32 %v642, 7
        %v644 = vsub.s32 %v641, %v643
        %v645 = vrot.slane %v638, %v644
        %v646 = vcombine.high %v645, 0
        %v647 = vcombine.low %v596, %v612
        %v649 = vunpack.c.l.s4 1983009808
        %v650 = vunpack.c.0.s8 %v649
        %v651 = vlaneseq
        %v652 = vshrl.u32 %v651, 7
        %v653 = vsub.s32 %v650, %v652
        %v654 = vrot.slane %v647, %v653
        %v655 = vcombine.low %v604, %v620
        %v657 = vunpack.c.l.s4 1983009808
        %v658 = vunpack.c.0.s8 %v657
        %v659 = vlaneseq
        %v660 = vshrl.u32 %v659, 7
        %v661 = vsub.s32 %v658, %v660
        %v662 = vrot.slane %v655, %v661
        %v663 = vcombine.low %v654, %v662
        %v665 = vunpack.c.l.s4 1934713408
        %v666 = vunpack.c.0.s8 %v665
        %v667 = vlaneseq
        %v668 = vshrl.u32 %v667, 7
        %v669 = vsub.s32 %v666, %v668
        %v670 = vrot.slane %v663, %v669
        %v671 = vcombine.high %v670, 0
        %v674 = vpack.i.b16 %v670, %v645
        %v675 = vshrl.u32 %v645, 16
        %v676 = vshrl.u32 %v670, 16
        %v677 = vpack.i.b16 %v676, %v675
        %v680 = vpack.i.b16 %v671, %v646
        %v681 = vshrl.u32 %v646, 16
        %v682 = vshrl.u32 %v671, 16
        %v683 = vpack.i.b16 %v682, %v681
        %v684 = vpack.c.bf16 %v514, %v514
        %686 = vrot.lane.b32.xlu0 %v684, 120
        %v687 = vpop.permute.xlu0 %686
        %688 = vrot.lane.b32.xlu0 %v684, 112
        %v689 = vpop.permute.xlu0 %688
        %690 = vrot.lane.b32.xlu0 %v684, 104
        %v691 = vpop.permute.xlu0 %690
        %692 = vrot.lane.b32.xlu0 %v684, 64
        %v693 = vpop.permute.xlu0 %692
        %694 = vrot.lane.b32.xlu0 %v687, 64
        %v695 = vpop.permute.xlu0 %694
        %696 = vrot.lane.b32.xlu0 %v689, 64
        %v697 = vpop.permute.xlu0 %696
        %698 = vrot.lane.b32.xlu0 %v691, 64
        %v699 = vpop.permute.xlu0 %698
        %v702 = vunpack.c.l.s4 1983009808
        %v703 = vunpack.c.0.s8 %v702
        %v704 = vlaneseq
        %v705 = vshrl.u32 %v704, 7
        %v706 = vsub.s32 %v703, %v705
        %v707 = vrot.slane %v693, %v706
        %v710 = vunpack.c.l.s4 1983009808
        %v711 = vunpack.c.0.s8 %v710
        %v712 = vlaneseq
        %v713 = vshrl.u32 %v712, 7
        %v714 = vsub.s32 %v711, %v713
        %v715 = vrot.slane %v697, %v714
        %v716 = vcombine.low %v707, %v715
        %v717 = vcombine.high %v707, %v715
        %v719 = vunpack.c.l.s4 1934713408
        %v720 = vunpack.c.0.s8 %v719
        %v721 = vlaneseq
        %v722 = vshrl.u32 %v721, 7
        %v723 = vsub.s32 %v720, %v722
        %v724 = vrot.slane %v716, %v723
        %v726 = vunpack.c.l.s4 1934713408
        %v727 = vunpack.c.0.s8 %v726
        %v728 = vlaneseq
        %v729 = vshrl.u32 %v728, 7
        %v730 = vsub.s32 %v727, %v729
        %v731 = vrot.slane %v717, %v730
        %v732 = vcombine.high %v724, 0
        %v733 = vcombine.high %v731, 0
        %v736 = vunpack.c.l.s4 1983009808
        %v737 = vunpack.c.0.s8 %v736
        %v738 = vlaneseq
        %v739 = vshrl.u32 %v738, 7
        %v740 = vsub.s32 %v737, %v739
        %v741 = vrot.slane %v695, %v740
        %v744 = vunpack.c.l.s4 1983009808
        %v745 = vunpack.c.0.s8 %v744
        %v746 = vlaneseq
        %v747 = vshrl.u32 %v746, 7
        %v748 = vsub.s32 %v745, %v747
        %v749 = vrot.slane %v699, %v748
        %v750 = vcombine.low %v741, %v749
        %v751 = vcombine.high %v741, %v749
        %v753 = vunpack.c.l.s4 1934713408
        %v754 = vunpack.c.0.s8 %v753
        %v755 = vlaneseq
        %v756 = vshrl.u32 %v755, 7
        %v757 = vsub.s32 %v754, %v756
        %v758 = vrot.slane %v750, %v757
        %v760 = vunpack.c.l.s4 1934713408
        %v761 = vunpack.c.0.s8 %v760
        %v762 = vlaneseq
        %v763 = vshrl.u32 %v762, 7
        %v764 = vsub.s32 %v761, %v763
        %v765 = vrot.slane %v751, %v764
        %v766 = vcombine.high %v758, 0
        %v767 = vcombine.high %v765, 0
        %v770 = vpack.i.b16 %v758, %v724
        %v772 = vshrl.u32 %v724, 16
        %v773 = vshrl.u32 %v758, 16
        %v774 = vpack.i.b16 %v773, %v772
        %v778 = vpack.i.b16 %v766, %v732
        %v780 = vshrl.u32 %v732, 16
        %v781 = vshrl.u32 %v766, 16
        %v782 = vpack.i.b16 %v781, %v780
        %v786 = vpack.i.b16 %v765, %v731
        %v788 = vshrl.u32 %v731, 16
        %v789 = vshrl.u32 %v765, 16
        %v790 = vpack.i.b16 %v789, %v788
        %v794 = vpack.i.b16 %v767, %v733
        %v796 = vshrl.u32 %v733, 16
        %v797 = vshrl.u32 %v767, 16
        %v798 = vpack.i.b16 %v797, %v796
        %v800 = vcombine.low %v770, %v786
        %v802 = vunpack.c.l.s4 1983009808
        %v803 = vunpack.c.0.s8 %v802
        %v804 = vlaneseq
        %v805 = vshrl.u32 %v804, 7
        %v806 = vsub.s32 %v803, %v805
        %v807 = vrot.slane %v800, %v806
        %v808 = vcombine.low %v778, %v794
        %v810 = vunpack.c.l.s4 1983009808
        %v811 = vunpack.c.0.s8 %v810
        %v812 = vlaneseq
        %v813 = vshrl.u32 %v812, 7
        %v814 = vsub.s32 %v811, %v813
        %v815 = vrot.slane %v808, %v814
        %v816 = vcombine.low %v807, %v815
        %v818 = vunpack.c.l.s4 1934713408
        %v819 = vunpack.c.0.s8 %v818
        %v820 = vlaneseq
        %v821 = vshrl.u32 %v820, 7
        %v822 = vsub.s32 %v819, %v821
        %v823 = vrot.slane %v816, %v822
        %v824 = vcombine.high %v823, 0
        %v825 = vcombine.low %v774, %v790
        %v827 = vunpack.c.l.s4 1983009808
        %v828 = vunpack.c.0.s8 %v827
        %v829 = vlaneseq
        %v830 = vshrl.u32 %v829, 7
        %v831 = vsub.s32 %v828, %v830
        %v832 = vrot.slane %v825, %v831
        %v833 = vcombine.low %v782, %v798
        %v835 = vunpack.c.l.s4 1983009808
        %v836 = vunpack.c.0.s8 %v835
        %v837 = vlaneseq
        %v838 = vshrl.u32 %v837, 7
        %v839 = vsub.s32 %v836, %v838
        %v840 = vrot.slane %v833, %v839
        %v841 = vcombine.low %v832, %v840
        %v843 = vunpack.c.l.s4 1934713408
        %v844 = vunpack.c.0.s8 %v843
        %v845 = vlaneseq
        %v846 = vshrl.u32 %v845, 7
        %v847 = vsub.s32 %v844, %v846
        %v848 = vrot.slane %v841, %v847
        %v849 = vcombine.high %v848, 0
        %v852 = vpack.i.b16 %v848, %v823
        %v853 = vshrl.u32 %v823, 16
        %v854 = vshrl.u32 %v848, 16
        %v855 = vpack.i.b16 %v854, %v853
        %v858 = vpack.i.b16 %v849, %v824
        %v859 = vshrl.u32 %v824, 16
        %v860 = vshrl.u32 %v849, 16
        %v861 = vpack.i.b16 %v860, %v859
        %v862 = vpack.c.bf16 %v484, %v484
        %864 = vrot.lane.b32.xlu0 %v862, 120
        %v865 = vpop.permute.xlu0 %864
        %866 = vrot.lane.b32.xlu0 %v862, 112
        %v867 = vpop.permute.xlu0 %866
        %868 = vrot.lane.b32.xlu0 %v862, 104
        %v869 = vpop.permute.xlu0 %868
        %v871 = vunpack.c.l.s4 1983009808
        %v872 = vunpack.c.0.s8 %v871
        %v873 = vlaneseq
        %v874 = vshrl.u32 %v873, 7
        %v875 = vsub.s32 %v872, %v874
        %v876 = vrot.slane %v862, %v875
        %v879 = vunpack.c.l.s4 1983009808
        %v880 = vunpack.c.0.s8 %v879
        %v881 = vlaneseq
        %v882 = vshrl.u32 %v881, 7
        %v883 = vsub.s32 %v880, %v882
        %v884 = vrot.slane %v867, %v883
        %v885 = vcombine.low %v876, %v884
        %v886 = vcombine.high %v876, %v884
        %v888 = vunpack.c.l.s4 1934713408
        %v889 = vunpack.c.0.s8 %v888
        %v890 = vlaneseq
        %v891 = vshrl.u32 %v890, 7
        %v892 = vsub.s32 %v889, %v891
        %v893 = vrot.slane %v885, %v892
        %v895 = vunpack.c.l.s4 1934713408
        %v896 = vunpack.c.0.s8 %v895
        %v897 = vlaneseq
        %v898 = vshrl.u32 %v897, 7
        %v899 = vsub.s32 %v896, %v898
        %v900 = vrot.slane %v886, %v899
        %v901 = vcombine.high %v893, 0
        %v902 = vcombine.high %v900, 0
        %v905 = vunpack.c.l.s4 1983009808
        %v906 = vunpack.c.0.s8 %v905
        %v907 = vlaneseq
        %v908 = vshrl.u32 %v907, 7
        %v909 = vsub.s32 %v906, %v908
        %v910 = vrot.slane %v865, %v909
        %v913 = vunpack.c.l.s4 1983009808
        %v914 = vunpack.c.0.s8 %v913
        %v915 = vlaneseq
        %v916 = vshrl.u32 %v915, 7
        %v917 = vsub.s32 %v914, %v916
        %v918 = vrot.slane %v869, %v917
        %v919 = vcombine.low %v910, %v918
        %v920 = vcombine.high %v910, %v918
        %v922 = vunpack.c.l.s4 1934713408
        %v923 = vunpack.c.0.s8 %v922
        %v924 = vlaneseq
        %v925 = vshrl.u32 %v924, 7
        %v926 = vsub.s32 %v923, %v925
        %v927 = vrot.slane %v919, %v926
        %v929 = vunpack.c.l.s4 1934713408
        %v930 = vunpack.c.0.s8 %v929
        %v931 = vlaneseq
        %v932 = vshrl.u32 %v931, 7
        %v933 = vsub.s32 %v930, %v932
        %v934 = vrot.slane %v920, %v933
        %v935 = vcombine.high %v927, 0
        %v936 = vcombine.high %v934, 0
        %v939 = vpack.i.b16 %v927, %v893
        %v941 = vshrl.u32 %v893, 16
        %v942 = vshrl.u32 %v927, 16
        %v943 = vpack.i.b16 %v942, %v941
        %v947 = vpack.i.b16 %v935, %v901
        %v949 = vshrl.u32 %v901, 16
        %v950 = vshrl.u32 %v935, 16
        %v951 = vpack.i.b16 %v950, %v949
        %v955 = vpack.i.b16 %v934, %v900
        %v957 = vshrl.u32 %v900, 16
        %v958 = vshrl.u32 %v934, 16
        %v959 = vpack.i.b16 %v958, %v957
        %v963 = vpack.i.b16 %v936, %v902
        %v965 = vshrl.u32 %v902, 16
        %v966 = vshrl.u32 %v936, 16
        %v967 = vpack.i.b16 %v966, %v965
        %v969 = vcombine.low %v939, %v955
        %v971 = vunpack.c.l.s4 1983009808
        %v972 = vunpack.c.0.s8 %v971
        %v973 = vlaneseq
        %v974 = vshrl.u32 %v973, 7
        %v975 = vsub.s32 %v972, %v974
        %v976 = vrot.slane %v969, %v975
        %v977 = vcombine.low %v947, %v963
        %v979 = vunpack.c.l.s4 1983009808
        %v980 = vunpack.c.0.s8 %v979
        %v981 = vlaneseq
        %v982 = vshrl.u32 %v981, 7
        %v983 = vsub.s32 %v980, %v982
        %v984 = vrot.slane %v977, %v983
        %v985 = vcombine.low %v976, %v984
        %v987 = vunpack.c.l.s4 1934713408
        %v988 = vunpack.c.0.s8 %v987
        %v989 = vlaneseq
        %v990 = vshrl.u32 %v989, 7
        %v991 = vsub.s32 %v988, %v990
        %v992 = vrot.slane %v985, %v991
        %v993 = vcombine.high %v992, 0
        %v994 = vcombine.low %v943, %v959
        %v996 = vunpack.c.l.s4 1983009808
        %v997 = vunpack.c.0.s8 %v996
        %v998 = vlaneseq
        %v999 = vshrl.u32 %v998, 7
        %v1000 = vsub.s32 %v997, %v999
        %v1001 = vrot.slane %v994, %v1000
        %v1002 = vcombine.low %v951, %v967
        %v1004 = vunpack.c.l.s4 1983009808
        %v1005 = vunpack.c.0.s8 %v1004
        %v1006 = vlaneseq
        %v1007 = vshrl.u32 %v1006, 7
        %v1008 = vsub.s32 %v1005, %v1007
        %v1009 = vrot.slane %v1002, %v1008
        %v1010 = vcombine.low %v1001, %v1009
        %v1012 = vunpack.c.l.s4 1934713408
        %v1013 = vunpack.c.0.s8 %v1012
        %v1014 = vlaneseq
        %v1015 = vshrl.u32 %v1014, 7
        %v1016 = vsub.s32 %v1013, %v1015
        %v1017 = vrot.slane %v1010, %v1016
        %v1018 = vcombine.high %v1017, 0
        %v1021 = vpack.i.b16 %v1017, %v992
        %v1022 = vshrl.u32 %v992, 16
        %v1023 = vshrl.u32 %v1017, 16
        %v1024 = vpack.i.b16 %v1023, %v1022
        %v1027 = vpack.i.b16 %v1018, %v993
        %v1028 = vshrl.u32 %v993, 16
        %v1029 = vshrl.u32 %v1018, 16
        %v1030 = vpack.i.b16 %v1029, %v1028
        %vm1031 = vcmask 64512
        %v1033 = vsel %vm1031, %v674, 0
        %v1036 = vsel %vm1031, %v852, 0
        %1038 = vmatprep.subr.bf16.mxu0 0
        %1039 = vmatpush1.bf16.xpose.msra.mxu0 %v1036
        %1040 = vmatprep.subr.bf16.mxu0 0
        %1041 = vmatpush1.bf16.xpose.msra.mxu0 0
        %1042 = vmatprep.subr.bf16.mxu0 0
        %1043 = vmatpush1.bf16.xpose.msra.mxu0 0
        %1044 = vmatprep.subr.bf16.mxu0 0
        %1045 = vmatpush1.bf16.xpose.msra.mxu0 0
        %1046 = vmatprep.subr.bf16.mxu0 0
        %1047 = vmatpush1.bf16.xpose.msra.mxu0 0
        %1048 = vmatprep.subr.bf16.mxu0 0
        %1049 = vmatpush1.bf16.xpose.msra.mxu0 0
        %1050 = vmatprep.subr.bf16.mxu0 0
        %1051 = vmatpush1.bf16.xpose.msra.mxu0 0
        %1052 = vmatprep.subr.bf16.mxu0 0
        %1053 = vmatpush1.bf16.xpose.msra.mxu0 0
        %1054 = vmatprep.subr.bf16.mxu0 0
        %1055 = vmatpush1.bf16.xpose.msra.mxu0 0
        %1056 = vmatprep.subr.bf16.mxu0 0
        %1057 = vmatpush1.bf16.xpose.msra.mxu0 0
        %1058 = vmatprep.subr.bf16.mxu0 0
        %1059 = vmatpush1.bf16.xpose.msra.mxu0 0
        %1060 = vmatprep.subr.bf16.mxu0 0
        %1061 = vmatpush1.bf16.xpose.msra.mxu0 0
        %1062 = vmatprep.subr.bf16.mxu0 0
        %1063 = vmatpush1.bf16.xpose.msra.mxu0 0
        %1064 = vmatprep.subr.bf16.mxu0 0
        %1065 = vmatpush1.bf16.xpose.msra.mxu0 0
        %1066 = vmatprep.subr.bf16.mxu0 0
        %1067 = vmatpush1.bf16.xpose.msra.mxu0 0
        %1068 = vmatprep.subr.bf16.mxu0 0
        %1069 = vmatpush1.bf16.xpose.msra.mxu0 0
        %1070 = vmatprep.mubr.bf16.mxu0 0
        %1071 = vmatmul.mubr.bf16.gmra.mrb[0].mxu0 %v1033
        %v1072 = vpop.f32.mrb[0].mxu0
        %v1073 = vadd.f32 0.0, %v1072
        %v1074 = vpop.f32.mrb[0].mxu0
        %v1075 = vpop.f32.mrb[0].mxu0
        %v1076 = vpop.f32.mrb[0].mxu0
        %1077 = vdwg.mxu0
        %v1079 = vsel %vm1031, %v677, 0
        %v1082 = vsel %vm1031, %v855, 0
        %1084 = vmatprep.subr.bf16.mxu0 0
        %1085 = vmatpush1.bf16.xpose.msra.mxu0 %v1082
        %1086 = vmatprep.subr.bf16.mxu0 0
        %1087 = vmatpush1.bf16.xpose.msra.mxu0 0
        %1088 = vmatprep.subr.bf16.mxu0 0
        %1089 = vmatpush1.bf16.xpose.msra.mxu0 0
        %1090 = vmatprep.subr.bf16.mxu0 0
        %1091 = vmatpush1.bf16.xpose.msra.mxu0 0
        %1092 = vmatprep.subr.bf16.mxu0 0
        %1093 = vmatpush1.bf16.xpose.msra.mxu0 0
        %1094 = vmatprep.subr.bf16.mxu0 0
        %1095 = vmatpush1.bf16.xpose.msra.mxu0 0
        %1096 = vmatprep.subr.bf16.mxu0 0
        %1097 = vmatpush1.bf16.xpose.msra.mxu0 0
        %1098 = vmatprep.subr.bf16.mxu0 0
        %1099 = vmatpush1.bf16.xpose.msra.mxu0 0
        %1100 = vmatprep.subr.bf16.mxu0 0
        %1101 = vmatpush1.bf16.xpose.msra.mxu0 0
        %1102 = vmatprep.subr.bf16.mxu0 0
        %1103 = vmatpush1.bf16.xpose.msra.mxu0 0
        %1104 = vmatprep.subr.bf16.mxu0 0
        %1105 = vmatpush1.bf16.xpose.msra.mxu0 0
        %1106 = vmatprep.subr.bf16.mxu0 0
        %1107 = vmatpush1.bf16.xpose.msra.mxu0 0
        %1108 = vmatprep.subr.bf16.mxu0 0
        %1109 = vmatpush1.bf16.xpose.msra.mxu0 0
        %1110 = vmatprep.subr.bf16.mxu0 0
        %1111 = vmatpush1.bf16.xpose.msra.mxu0 0
        %1112 = vmatprep.subr.bf16.mxu0 0
        %1113 = vmatpush1.bf16.xpose.msra.mxu0 0
        %1114 = vmatprep.subr.bf16.mxu0 0
        %1115 = vmatpush1.bf16.xpose.msra.mxu0 0
        %1116 = vmatprep.mubr.bf16.mxu0 0
        %1117 = vmatmul.mubr.bf16.gmra.mrb[0].mxu0 %v1079
        %v1118 = vpop.f32.mrb[0].mxu0
        %v1119 = vadd.f32 0.0, %v1118
        %v1120 = vpop.f32.mrb[0].mxu0
        %v1121 = vpop.f32.mrb[0].mxu0
        %v1122 = vpop.f32.mrb[0].mxu0
        %1123 = vdwg.mxu0
        %v1125 = vsel %vm1031, %v680, 0
        %v1128 = vsel %vm1031, %v858, 0
        %1130 = vmatprep.subr.bf16.mxu0 0
        %1131 = vmatpush1.bf16.xpose.msra.mxu0 %v1128
        %1132 = vmatprep.subr.bf16.mxu0 0
        %1133 = vmatpush1.bf16.xpose.msra.mxu0 0
        %1134 = vmatprep.subr.bf16.mxu0 0
        %1135 = vmatpush1.bf16.xpose.msra.mxu0 0
        %1136 = vmatprep.subr.bf16.mxu0 0
        %1137 = vmatpush1.bf16.xpose.msra.mxu0 0
        %1138 = vmatprep.subr.bf16.mxu0 0
        %1139 = vmatpush1.bf16.xpose.msra.mxu0 0
        %1140 = vmatprep.subr.bf16.mxu0 0
        %1141 = vmatpush1.bf16.xpose.msra.mxu0 0
        %1142 = vmatprep.subr.bf16.mxu0 0
        %1143 = vmatpush1.bf16.xpose.msra.mxu0 0
        %1144 = vmatprep.subr.bf16.mxu0 0
        %1145 = vmatpush1.bf16.xpose.msra.mxu0 0
        %1146 = vmatprep.subr.bf16.mxu0 0
        %1147 = vmatpush1.bf16.xpose.msra.mxu0 0
        %1148 = vmatprep.subr.bf16.mxu0 0
        %1149 = vmatpush1.bf16.xpose.msra.mxu0 0
        %1150 = vmatprep.subr.bf16.mxu0 0
        %1151 = vmatpush1.bf16.xpose.msra.mxu0 0
        %1152 = vmatprep.subr.bf16.mxu0 0
        %1153 = vmatpush1.bf16.xpose.msra.mxu0 0
        %1154 = vmatprep.subr.bf16.mxu0 0
        %1155 = vmatpush1.bf16.xpose.msra.mxu0 0
        %1156 = vmatprep.subr.bf16.mxu0 0
        %1157 = vmatpush1.bf16.xpose.msra.mxu0 0
        %1158 = vmatprep.subr.bf16.mxu0 0
        %1159 = vmatpush1.bf16.xpose.msra.mxu0 0
        %1160 = vmatprep.subr.bf16.mxu0 0
        %1161 = vmatpush1.bf16.xpose.msra.mxu0 0
        %1162 = vmatprep.mubr.bf16.mxu0 0
        %1163 = vmatmul.mubr.bf16.gmra.mrb[0].mxu0 %v1125
        %v1164 = vpop.f32.mrb[0].mxu0
        %v1165 = vadd.f32 0.0, %v1164
        %v1166 = vpop.f32.mrb[0].mxu0
        %v1167 = vpop.f32.mrb[0].mxu0
        %v1168 = vpop.f32.mrb[0].mxu0
        %1169 = vdwg.mxu0
        %v1171 = vsel %vm1031, %v683, 0
        %v1174 = vsel %vm1031, %v861, 0
        %1176 = vmatprep.subr.bf16.mxu0 0
        %1177 = vmatpush1.bf16.xpose.msra.mxu0 %v1174
        %1178 = vmatprep.subr.bf16.mxu0 0
        %1179 = vmatpush1.bf16.xpose.msra.mxu0 0
        %1180 = vmatprep.subr.bf16.mxu0 0
        %1181 = vmatpush1.bf16.xpose.msra.mxu0 0
        %1182 = vmatprep.subr.bf16.mxu0 0
        %1183 = vmatpush1.bf16.xpose.msra.mxu0 0
        %1184 = vmatprep.subr.bf16.mxu0 0
        %1185 = vmatpush1.bf16.xpose.msra.mxu0 0
        %1186 = vmatprep.subr.bf16.mxu0 0
        %1187 = vmatpush1.bf16.xpose.msra.mxu0 0
        %1188 = vmatprep.subr.bf16.mxu0 0
        %1189 = vmatpush1.bf16.xpose.msra.mxu0 0
        %1190 = vmatprep.subr.bf16.mxu0 0
        %1191 = vmatpush1.bf16.xpose.msra.mxu0 0
        %1192 = vmatprep.subr.bf16.mxu0 0
        %1193 = vmatpush1.bf16.xpose.msra.mxu0 0
        %1194 = vmatprep.subr.bf16.mxu0 0
        %1195 = vmatpush1.bf16.xpose.msra.mxu0 0
        %1196 = vmatprep.subr.bf16.mxu0 0
        %1197 = vmatpush1.bf16.xpose.msra.mxu0 0
        %1198 = vmatprep.subr.bf16.mxu0 0
        %1199 = vmatpush1.bf16.xpose.msra.mxu0 0
        %1200 = vmatprep.subr.bf16.mxu0 0
        %1201 = vmatpush1.bf16.xpose.msra.mxu0 0
        %1202 = vmatprep.subr.bf16.mxu0 0
        %1203 = vmatpush1.bf16.xpose.msra.mxu0 0
        %1204 = vmatprep.subr.bf16.mxu0 0
        %1205 = vmatpush1.bf16.xpose.msra.mxu0 0
        %1206 = vmatprep.subr.bf16.mxu0 0
        %1207 = vmatpush1.bf16.xpose.msra.mxu0 0
        %1208 = vmatprep.mubr.bf16.mxu0 0
        %1209 = vmatmul.mubr.bf16.gmra.mrb[0].mxu0 %v1171
        %v1210 = vpop.f32.mrb[0].mxu0
        %v1211 = vadd.f32 0.0, %v1210
        %v1212 = vpop.f32.mrb[0].mxu0
        %v1213 = vpop.f32.mrb[0].mxu0
        %v1214 = vpop.f32.mrb[0].mxu0
        %1215 = vdwg.mxu0
        %v1216 = vmul.f32 %v1073, 0.35355338
        %v1217 = vmul.f32 %v1119, 0.35355338
        %v1218 = vmul.f32 %v1165, 0.35355338
        %v1219 = vmul.f32 %v1211, 0.35355338
        %v1220 = vlaneseq
        %v1221 = vshrl.u32 %v1220, 7
        %v1222 = vlaneseq
        %v1223 = vand.u32 %v1222, 127
        %vm1224 = vcmp.ge.s32.totalorder %v1221, %v1223
        %v1225 = vsel %vm1224, 1, 0
        %vm1226 = vcmp.eq.s32.totalorder %v1225, 1
        %v1227 = vsel %vm1226, %v1216, -inf
        %v1228 = vsel %vm1226, %v1217, -inf
        %v1229 = vsel %vm1226, %v1218, -inf
        %v1230 = vsel %vm1226, %v1219, -inf
        %v1231 = vsel %vm1031, %v1227, -inf
        %1232 = vmax.xlane.f32.xlu0 %v1231
        %v1233 = vpop.xlane.xlu0 %1232
        %v1234 = vsel %vm1031, %v1228, -inf
        %1235 = vmax.xlane.f32.xlu0 %v1234
        %v1236 = vpop.xlane.xlu0 %1235
        %v1237 = vsel %vm1031, %v1229, -inf
        %1238 = vmax.xlane.f32.xlu0 %v1237
        %v1239 = vpop.xlane.xlu0 %1238
        %v1240 = vsel %vm1031, %v1230, -inf
        %1241 = vmax.xlane.f32.xlu0 %v1240
        %v1242 = vpop.xlane.xlu0 %1241
        %v1243 = vsub.f32 %v1227, %v1233
        %v1244 = vsub.f32 %v1228, %v1236
        %v1245 = vsub.f32 %v1229, %v1239
        %v1246 = vsub.f32 %v1230, %v1242
        %v1247 = vmul.f32 %v1243, 1.442695
        %v1248 = vpow.pop %v1247
        %v1249 = vmul.f32 %v1244, 1.442695
        %v1250 = vpow.pop %v1249
        %v1251 = vmul.f32 %v1245, 1.442695
        %v1252 = vpow.pop %v1251
        %v1253 = vmul.f32 %v1246, 1.442695
        %v1254 = vpow.pop %v1253
        %v1255 = vsel %vm1031, %v1248, 0.0
        %1256 = vadd.xlane.f32.xlu0 %v1255
        %v1257 = vpop.xlane.xlu0 %1256
        %v1258 = vsel %vm1031, %v1250, 0.0
        %1259 = vadd.xlane.f32.xlu0 %v1258
        %v1260 = vpop.xlane.xlu0 %1259
        %v1261 = vsel %vm1031, %v1252, 0.0
        %1262 = vadd.xlane.f32.xlu0 %v1261
        %v1263 = vpop.xlane.xlu0 %1262
        %v1264 = vsel %vm1031, %v1254, 0.0
        %1265 = vadd.xlane.f32.xlu0 %v1264
        %v1266 = vpop.xlane.xlu0 %1265
        %v1267 = vrcp.pop %v1257
        %v1268 = vrcp.pop %v1260
        %v1269 = vrcp.pop %v1263
        %v1270 = vrcp.pop %v1266
        %v1271 = vmul.f32 %v1248, %v1267
        %v1272 = vmul.f32 %v1250, %v1268
        %v1273 = vmul.f32 %v1252, %v1269
        %v1274 = vmul.f32 %v1254, %v1270
        %v1275 = vpack.c.bf16 %v1271, %v1271
        %v1276 = vpack.c.bf16 %v1272, %v1272
        %v1277 = vpack.c.bf16 %v1273, %v1273
        %v1278 = vpack.c.bf16 %v1274, %v1274
        %v1280 = vsel %vm1031, %v1275, 0
        %vm1282 = vcmask 1043456
        %v1284 = vsel %vm1282, %v1021, 0
        %1286 = vmatprep.subr.bf16.mxu0 0
        %1287 = vmatpush1.bf16.msra.mxu0 %v1284
        %1288 = vmatprep.subr.bf16.mxu0 0
        %1289 = vmatpush1.bf16.msra.mxu0 0
        %1290 = vmatprep.subr.bf16.mxu0 0
        %1291 = vmatpush1.bf16.msra.mxu0 0
        %1292 = vmatprep.subr.bf16.mxu0 0
        %1293 = vmatpush1.bf16.msra.mxu0 0
        %1294 = vmatprep.subr.bf16.mxu0 0
        %1295 = vmatpush1.bf16.msra.mxu0 0
        %1296 = vmatprep.subr.bf16.mxu0 0
        %1297 = vmatpush1.bf16.msra.mxu0 0
        %1298 = vmatprep.subr.bf16.mxu0 0
        %1299 = vmatpush1.bf16.msra.mxu0 0
        %1300 = vmatprep.subr.bf16.mxu0 0
        %1301 = vmatpush1.bf16.msra.mxu0 0
        %1302 = vmatprep.subr.bf16.mxu0 0
        %1303 = vmatpush1.bf16.msra.mxu0 0
        %1304 = vmatprep.subr.bf16.mxu0 0
        %1305 = vmatpush1.bf16.msra.mxu0 0
        %1306 = vmatprep.subr.bf16.mxu0 0
        %1307 = vmatpush1.bf16.msra.mxu0 0
        %1308 = vmatprep.subr.bf16.mxu0 0
        %1309 = vmatpush1.bf16.msra.mxu0 0
        %1310 = vmatprep.subr.bf16.mxu0 0
        %1311 = vmatpush1.bf16.msra.mxu0 0
        %1312 = vmatprep.subr.bf16.mxu0 0
        %1313 = vmatpush1.bf16.msra.mxu0 0
        %1314 = vmatprep.subr.bf16.mxu0 0
        %1315 = vmatpush1.bf16.msra.mxu0 0
        %1316 = vmatprep.subr.bf16.mxu0 0
        %1317 = vmatpush1.bf16.msra.mxu0 0
        %1318 = vmatprep.mubr.bf16.mxu0 0
        %1319 = vmatmul.mubr.bf16.gmra.mrb[0].mxu0 %v1280
        %v1320 = vpop.f32.mrb[0].mxu0
        %v1321 = vadd.f32 0.0, %v1320
        %v1322 = vpop.f32.mrb[0].mxu0
        %v1323 = vpop.f32.mrb[0].mxu0
        %v1324 = vpop.f32.mrb[0].mxu0
        %1325 = vdwg.mxu0
        %v1327 = vsel %vm1031, %v1276, 0
        %v1330 = vsel %vm1282, %v1024, 0
        %1332 = vmatprep.subr.bf16.mxu0 0
        %1333 = vmatpush1.bf16.msra.mxu0 %v1330
        %1334 = vmatprep.subr.bf16.mxu0 0
        %1335 = vmatpush1.bf16.msra.mxu0 0
        %1336 = vmatprep.subr.bf16.mxu0 0
        %1337 = vmatpush1.bf16.msra.mxu0 0
        %1338 = vmatprep.subr.bf16.mxu0 0
        %1339 = vmatpush1.bf16.msra.mxu0 0
        %1340 = vmatprep.subr.bf16.mxu0 0
        %1341 = vmatpush1.bf16.msra.mxu0 0
        %1342 = vmatprep.subr.bf16.mxu0 0
        %1343 = vmatpush1.bf16.msra.mxu0 0
        %1344 = vmatprep.subr.bf16.mxu0 0
        %1345 = vmatpush1.bf16.msra.mxu0 0
        %1346 = vmatprep.subr.bf16.mxu0 0
        %1347 = vmatpush1.bf16.msra.mxu0 0
        %1348 = vmatprep.subr.bf16.mxu0 0
        %1349 = vmatpush1.bf16.msra.mxu0 0
        %1350 = vmatprep.subr.bf16.mxu0 0
        %1351 = vmatpush1.bf16.msra.mxu0 0
        %1352 = vmatprep.subr.bf16.mxu0 0
        %1353 = vmatpush1.bf16.msra.mxu0 0
        %1354 = vmatprep.subr.bf16.mxu0 0
        %1355 = vmatpush1.bf16.msra.mxu0 0
        %1356 = vmatprep.subr.bf16.mxu0 0
        %1357 = vmatpush1.bf16.msra.mxu0 0
        %1358 = vmatprep.subr.bf16.mxu0 0
        %1359 = vmatpush1.bf16.msra.mxu0 0
        %1360 = vmatprep.subr.bf16.mxu0 0
        %1361 = vmatpush1.bf16.msra.mxu0 0
        %1362 = vmatprep.subr.bf16.mxu0 0
        %1363 = vmatpush1.bf16.msra.mxu0 0
        %1364 = vmatprep.mubr.bf16.mxu0 0
        %1365 = vmatmul.mubr.bf16.gmra.mrb[0].mxu0 %v1327
        %v1366 = vpop.f32.mrb[0].mxu0
        %v1367 = vadd.f32 0.0, %v1366
        %v1368 = vpop.f32.mrb[0].mxu0
        %v1369 = vpop.f32.mrb[0].mxu0
        %v1370 = vpop.f32.mrb[0].mxu0
        %1371 = vdwg.mxu0
        %v1373 = vsel %vm1031, %v1277, 0
        %v1376 = vsel %vm1282, %v1027, 0
        %1378 = vmatprep.subr.bf16.mxu0 0
        %1379 = vmatpush1.bf16.msra.mxu0 %v1376
        %1380 = vmatprep.subr.bf16.mxu0 0
        %1381 = vmatpush1.bf16.msra.mxu0 0
        %1382 = vmatprep.subr.bf16.mxu0 0
        %1383 = vmatpush1.bf16.msra.mxu0 0
        %1384 = vmatprep.subr.bf16.mxu0 0
        %1385 = vmatpush1.bf16.msra.mxu0 0
        %1386 = vmatprep.subr.bf16.mxu0 0
        %1387 = vmatpush1.bf16.msra.mxu0 0
        %1388 = vmatprep.subr.bf16.mxu0 0
        %1389 = vmatpush1.bf16.msra.mxu0 0
        %1390 = vmatprep.subr.bf16.mxu0 0
        %1391 = vmatpush1.bf16.msra.mxu0 0
        %1392 = vmatprep.subr.bf16.mxu0 0
        %1393 = vmatpush1.bf16.msra.mxu0 0
        %1394 = vmatprep.subr.bf16.mxu0 0
        %1395 = vmatpush1.bf16.msra.mxu0 0
        %1396 = vmatprep.subr.bf16.mxu0 0
        %1397 = vmatpush1.bf16.msra.mxu0 0
        %1398 = vmatprep.subr.bf16.mxu0 0
        %1399 = vmatpush1.bf16.msra.mxu0 0
        %1400 = vmatprep.subr.bf16.mxu0 0
        %1401 = vmatpush1.bf16.msra.mxu0 0
        %1402 = vmatprep.subr.bf16.mxu0 0
        %1403 = vmatpush1.bf16.msra.mxu0 0
        %1404 = vmatprep.subr.bf16.mxu0 0
        %1405 = vmatpush1.bf16.msra.mxu0 0
        %1406 = vmatprep.subr.bf16.mxu0 0
        %1407 = vmatpush1.bf16.msra.mxu0 0
        %1408 = vmatprep.subr.bf16.mxu0 0
        %1409 = vmatpush1.bf16.msra.mxu0 0
        %1410 = vmatprep.mubr.bf16.mxu0 0
        %1411 = vmatmul.mubr.bf16.gmra.mrb[0].mxu0 %v1373
        %v1412 = vpop.f32.mrb[0].mxu0
        %v1413 = vadd.f32 0.0, %v1412
        %v1414 = vpop.f32.mrb[0].mxu0
        %v1415 = vpop.f32.mrb[0].mxu0
        %v1416 = vpop.f32.mrb[0].mxu0
        %1417 = vdwg.mxu0
        %v1419 = vsel %vm1031, %v1278, 0
        %v1422 = vsel %vm1282, %v1030, 0
        %1424 = vmatprep.subr.bf16.mxu0 0
        %1425 = vmatpush1.bf16.msra.mxu0 %v1422
        %1426 = vmatprep.subr.bf16.mxu0 0
        %1427 = vmatpush1.bf16.msra.mxu0 0
        %1428 = vmatprep.subr.bf16.mxu0 0
        %1429 = vmatpush1.bf16.msra.mxu0 0
        %1430 = vmatprep.subr.bf16.mxu0 0
        %1431 = vmatpush1.bf16.msra.mxu0 0
        %1432 = vmatprep.subr.bf16.mxu0 0
        %1433 = vmatpush1.bf16.msra.mxu0 0
        %1434 = vmatprep.subr.bf16.mxu0 0
        %1435 = vmatpush1.bf16.msra.mxu0 0
        %1436 = vmatprep.subr.bf16.mxu0 0
        %1437 = vmatpush1.bf16.msra.mxu0 0
        %1438 = vmatprep.subr.bf16.mxu0 0
        %1439 = vmatpush1.bf16.msra.mxu0 0
        %1440 = vmatprep.subr.bf16.mxu0 0
        %1441 = vmatpush1.bf16.msra.mxu0 0
        %1442 = vmatprep.subr.bf16.mxu0 0
        %1443 = vmatpush1.bf16.msra.mxu0 0
        %1444 = vmatprep.subr.bf16.mxu0 0
        %1445 = vmatpush1.bf16.msra.mxu0 0
        %1446 = vmatprep.subr.bf16.mxu0 0
        %1447 = vmatpush1.bf16.msra.mxu0 0
        %1448 = vmatprep.subr.bf16.mxu0 0
        %1449 = vmatpush1.bf16.msra.mxu0 0
        %1450 = vmatprep.subr.bf16.mxu0 0
        %1451 = vmatpush1.bf16.msra.mxu0 0
        %1452 = vmatprep.subr.bf16.mxu0 0
        %1453 = vmatpush1.bf16.msra.mxu0 0
        %1454 = vmatprep.subr.bf16.mxu0 0
        %1455 = vmatpush1.bf16.msra.mxu0 0
        %1456 = vmatprep.mubr.bf16.mxu0 0
        %1457 = vmatmul.mubr.bf16.gmra.mrb[0].mxu0 %v1419
        %v1458 = vpop.f32.mrb[0].mxu0
        %v1459 = vadd.f32 0.0, %v1458
        %v1460 = vpop.f32.mrb[0].mxu0
        %v1461 = vpop.f32.mrb[0].mxu0
        %v1462 = vpop.f32.mrb[0].mxu0
        %1463 = vdwg.mxu0
        %v1464 = vcombine.low %v1321, %v1413
        %v1465 = vcombine.high %v1321, %v1413
        %v1467 = vunpack.c.l.s4 1983009808
        %v1468 = vunpack.c.0.s8 %v1467
        %v1469 = vlaneseq
        %v1470 = vshrl.u32 %v1469, 7
        %v1471 = vsub.s32 %v1468, %v1470
        %v1472 = vrot.slane %v1464, %v1471
        %v1474 = vunpack.c.l.s4 1983009808
        %v1475 = vunpack.c.0.s8 %v1474
        %v1476 = vlaneseq
        %v1477 = vshrl.u32 %v1476, 7
        %v1478 = vsub.s32 %v1475, %v1477
        %v1479 = vrot.slane %v1465, %v1478
        %v1480 = vcombine.low %v1367, %v1459
        %v1481 = vcombine.high %v1367, %v1459
        %v1483 = vunpack.c.l.s4 1983009808
        %v1484 = vunpack.c.0.s8 %v1483
        %v1485 = vlaneseq
        %v1486 = vshrl.u32 %v1485, 7
        %v1487 = vsub.s32 %v1484, %v1486
        %v1488 = vrot.slane %v1480, %v1487
        %v1490 = vunpack.c.l.s4 1983009808
        %v1491 = vunpack.c.0.s8 %v1490
        %v1492 = vlaneseq
        %v1493 = vshrl.u32 %v1492, 7
        %v1494 = vsub.s32 %v1491, %v1493
        %v1495 = vrot.slane %v1481, %v1494
        %v1496 = vcombine.low %v1472, %v1488
        %v1497 = vcombine.high %v1472, %v1488
        %v1499 = vunpack.c.l.s4 1934713408
        %v1500 = vunpack.c.0.s8 %v1499
        %v1501 = vlaneseq
        %v1502 = vshrl.u32 %v1501, 7
        %v1503 = vsub.s32 %v1500, %v1502
        %v1504 = vrot.slane %v1496, %v1503
        %v1506 = vunpack.c.l.s4 1934713408
        %v1507 = vunpack.c.0.s8 %v1506
        %v1508 = vlaneseq
        %v1509 = vshrl.u32 %v1508, 7
        %v1510 = vsub.s32 %v1507, %v1509
        %v1511 = vrot.slane %v1497, %v1510
        %v1512 = vcombine.low %v1479, %v1495
        %v1513 = vcombine.high %v1479, %v1495
        %v1515 = vunpack.c.l.s4 1934713408
        %v1516 = vunpack.c.0.s8 %v1515
        %v1517 = vlaneseq
        %v1518 = vshrl.u32 %v1517, 7
        %v1519 = vsub.s32 %v1516, %v1518
        %v1520 = vrot.slane %v1512, %v1519
        %v1522 = vunpack.c.l.s4 1934713408
        %v1523 = vunpack.c.0.s8 %v1522
        %v1524 = vlaneseq
        %v1525 = vshrl.u32 %v1524, 7
        %v1526 = vsub.s32 %v1523, %v1525
        %v1527 = vrot.slane %v1513, %v1526
        %v1528 = vcombine.high %v1504, 0.0
        %v1529 = vcombine.high %v1511, 0.0
        %v1530 = vcombine.high %v1520, 0.0
        %v1531 = vcombine.high %v1527, 0.0
        %v1532 = vcombine.low %v1504, %v1511
        %v1534 = vunpack.c.l.s4 1983009808
        %v1535 = vunpack.c.0.s8 %v1534
        %v1536 = vlaneseq
        %v1537 = vshrl.u32 %v1536, 7
        %v1538 = vsub.s32 %v1535, %v1537
        %v1539 = vrot.slane %v1532, %v1538
        %v1540 = vcombine.low %v1528, %v1529
        %v1542 = vunpack.c.l.s4 1983009808
        %v1543 = vunpack.c.0.s8 %v1542
        %v1544 = vlaneseq
        %v1545 = vshrl.u32 %v1544, 7
        %v1546 = vsub.s32 %v1543, %v1545
        %v1547 = vrot.slane %v1540, %v1546
        %v1548 = vcombine.low %v1520, %v1527
        %v1550 = vunpack.c.l.s4 1983009808
        %v1551 = vunpack.c.0.s8 %v1550
        %v1552 = vlaneseq
        %v1553 = vshrl.u32 %v1552, 7
        %v1554 = vsub.s32 %v1551, %v1553
        %v1555 = vrot.slane %v1548, %v1554
        %v1556 = vcombine.low %v1530, %v1531
        %v1558 = vunpack.c.l.s4 1983009808
        %v1559 = vunpack.c.0.s8 %v1558
        %v1560 = vlaneseq
        %v1561 = vshrl.u32 %v1560, 7
        %v1562 = vsub.s32 %v1559, %v1561
        %v1563 = vrot.slane %v1556, %v1562
        %v1564 = vcombine.low %v1539, %v1547
        %v1565 = vcombine.high %v1539, %v1547
        %v1567 = vunpack.c.l.s4 1934713408
        %v1568 = vunpack.c.0.s8 %v1567
        %v1569 = vlaneseq
        %v1570 = vshrl.u32 %v1569, 7
        %v1571 = vsub.s32 %v1568, %v1570
        %v1572 = vrot.slane %v1564, %v1571
        %v1574 = vunpack.c.l.s4 1934713408
        %v1575 = vunpack.c.0.s8 %v1574
        %v1576 = vlaneseq
        %v1577 = vshrl.u32 %v1576, 7
        %v1578 = vsub.s32 %v1575, %v1577
        %v1579 = vrot.slane %v1565, %v1578
        %v1580 = vcombine.low %v1555, %v1563
        %v1581 = vcombine.high %v1555, %v1563
        %v1583 = vunpack.c.l.s4 1934713408
        %v1584 = vunpack.c.0.s8 %v1583
        %v1585 = vlaneseq
        %v1586 = vshrl.u32 %v1585, 7
        %v1587 = vsub.s32 %v1584, %v1586
        %v1588 = vrot.slane %v1580, %v1587
        %v1590 = vunpack.c.l.s4 1934713408
        %v1591 = vunpack.c.0.s8 %v1590
        %v1592 = vlaneseq
        %v1593 = vshrl.u32 %v1592, 7
        %v1594 = vsub.s32 %v1591, %v1593
        %v1595 = vrot.slane %v1581, %v1594
        %v1596 = vcombine.low %v1572, %v1588
        %v1597 = vcombine.high %v1572, %v1588
        %v1598 = vcombine.low %v1579, %v1595
        %v1599 = vcombine.high %v1579, %v1595
        %1601 = vrot.lane.b32.xlu0 %v1597, 8
        %v1602 = vpop.permute.xlu0 %1601
        %1605 = vrot.lane.b32.xlu0 %v1598, 16
        %v1606 = vpop.permute.xlu0 %1605
        %1609 = vrot.lane.b32.xlu0 %v1599, 24
        %v1610 = vpop.permute.xlu0 %1609
        %v1612 = vsel %vm1031, %v1596, %v1602
        %vm1613 = vcmask 130048
        %v1614 = vsel %vm1613, %v1612, %v1606
        %vm1615 = vcmask 195584
        %v1616 = vsel %vm1615, %v1614, %v1610
        %v1617 = vpack.c.bf16 %v1616, %v1616
        %v1618 = vld [vmem:[%s5] sm:$0xf]
        %v1619 = vld [vmem:[%s5 + $0x4] sm:$0xf]
        %v1620 = vld [vmem:[%s5 + $0x8] sm:$0xf]
        %v1621 = vld [vmem:[%s5 + $0xc] sm:$0xf]
        %v1622 = vld [vmem:[%s6] sm:$0x1]
        %v1624 = vlaneseq
        %v1625 = vshrl.u32 %v1624, 7
        %v1626 = vsub.s32 0, %v1625
        %v1627 = vrot.slane %v1622, %v1626
        %v1633 = vunpack.c.l.b16 %v1618
        %v1634 = vunpack.c.l.b16 %v1619
        %v1635 = vunpack.c.l.b16 %v1620
        %v1636 = vunpack.c.l.b16 %v1621
        %v1637 = vpack.c.b16 %v1634, %v1633
        %v1638 = vpack.c.b16 %v1636, %v1635
        %v1642 = vsel %vm398, %v1617, 0
        %1644 = vmatprep.subr.bf16.mxu0 0
        %1645 = vmatpush1.bf16.msra.mxu0 %v1637
        %1646 = vmatprep.subr.bf16.mxu0 0
        %1647 = vmatpush1.bf16.msra.mxu0 %v1638
        %1648 = vmatprep.subr.bf16.mxu0 0
        %1649 = vmatpush1.bf16.msra.mxu0 0
        %1650 = vmatprep.subr.bf16.mxu0 0
        %1651 = vmatpush1.bf16.msra.mxu0 0
        %1652 = vmatprep.subr.bf16.mxu0 0
        %1653 = vmatpush1.bf16.msra.mxu0 0
        %1654 = vmatprep.subr.bf16.mxu0 0
        %1655 = vmatpush1.bf16.msra.mxu0 0
        %1656 = vmatprep.subr.bf16.mxu0 0
        %1657 = vmatpush1.bf16.msra.mxu0 0
        %1658 = vmatprep.subr.bf16.mxu0 0
        %1659 = vmatpush1.bf16.msra.mxu0 0
        %1660 = vmatprep.subr.bf16.mxu0 0
        %1661 = vmatpush1.bf16.msra.mxu0 0
        %1662 = vmatprep.subr.bf16.mxu0 0
        %1663 = vmatpush1.bf16.msra.mxu0 0
        %1664 = vmatprep.subr.bf16.mxu0 0
        %1665 = vmatpush1.bf16.msra.mxu0 0
        %1666 = vmatprep.subr.bf16.mxu0 0
        %1667 = vmatpush1.bf16.msra.mxu0 0
        %1668 = vmatprep.subr.bf16.mxu0 0
        %1669 = vmatpush1.bf16.msra.mxu0 0
        %1670 = vmatprep.subr.bf16.mxu0 0
        %1671 = vmatpush1.bf16.msra.mxu0 0
        %1672 = vmatprep.subr.bf16.mxu0 0
        %1673 = vmatpush1.bf16.msra.mxu0 0
        %1674 = vmatprep.subr.bf16.mxu0 0
        %1675 = vmatpush1.bf16.msra.mxu0 0
        %1676 = vmatprep.mubr.bf16.mxu0 0
        %1677 = vmatmul.mubr.bf16.gmra.mrb[0].mxu0 %v1642
        %v1678 = vpop.f32.mrb[0].mxu0
        %v1679 = vadd.f32 %v1627, %v1678
        %v1680 = vpop.f32.mrb[0].mxu0
        %v1681 = vpop.f32.mrb[0].mxu0
        %v1682 = vpop.f32.mrb[0].mxu0
        %1683 = vdwg.mxu0
        %v1684 = vadd.f32 %v396, %v1679
        %v1685 = vmul.f32 %v1684, %v1684
        %v1686 = vsel %vm398, %v1685, 0.0
        %1687 = vadd.xlane.f32.xlu0 %v1686
        %v1688 = vpop.xlane.xlu0 %1687
        %v1689 = vmul.f32 %v1688, %v402
        %v1690 = vadd.f32 %v1689, 1.1920929e-07
        %v1691 = vrsqrt.pop %v1690
        %v1692 = vmul.f32 %v1684, %v1691
        %v1693 = vpack.c.bf16 %v1692, %v1692
        %v1694 = vld [vmem:[%s7] sm:$0xf]
        %v1695 = vld [vmem:[%s7 + $0x4] sm:$0xf]
        %v1696 = vld [vmem:[%s7 + $0x8] sm:$0xf]
        %v1697 = vld [vmem:[%s7 + $0xc] sm:$0xf]
        %v1698 = vld [vmem:[%s8] sm:$0x1]
        %v1700 = vlaneseq
        %v1701 = vshrl.u32 %v1700, 7
        %v1702 = vsub.s32 0, %v1701
        %v1703 = vrot.slane %v1698, %v1702
        %v1709 = vunpack.c.l.b16 %v1694
        %v1710 = vunpack.c.l.b16 %v1695
        %v1711 = vunpack.c.l.b16 %v1696
        %v1712 = vunpack.c.l.b16 %v1697
        %v1713 = vpack.c.b16 %v1710, %v1709
        %v1714 = vpack.c.b16 %v1712, %v1711
        %v1718 = vsel %vm398, %v1693, 0
        %1720 = vmatprep.subr.bf16.mxu0 0
        %1721 = vmatpush1.bf16.msra.mxu0 %v1713
        %1722 = vmatprep.subr.bf16.mxu0 0
        %1723 = vmatpush1.bf16.msra.mxu0 %v1714
        %1724 = vmatprep.subr.bf16.mxu0 0
        %1725 = vmatpush1.bf16.msra.mxu0 0
        %1726 = vmatprep.subr.bf16.mxu0 0
        %1727 = vmatpush1.bf16.msra.mxu0 0
        %1728 = vmatprep.subr.bf16.mxu0 0
        %1729 = vmatpush1.bf16.msra.mxu0 0
        %1730 = vmatprep.subr.bf16.mxu0 0
        %1731 = vmatpush1.bf16.msra.mxu0 0
        %1732 = vmatprep.subr.bf16.mxu0 0
        %1733 = vmatpush1.bf16.msra.mxu0 0
        %1734 = vmatprep.subr.bf16.mxu0 0
        %1735 = vmatpush1.bf16.msra.mxu0 0
        %1736 = vmatprep.subr.bf16.mxu0 0
        %1737 = vmatpush1.bf16.msra.mxu0 0
        %1738 = vmatprep.subr.bf16.mxu0 0
        %1739 = vmatpush1.bf16.msra.mxu0 0
        %1740 = vmatprep.subr.bf16.mxu0 0
        %1741 = vmatpush1.bf16.msra.mxu0 0
        %1742 = vmatprep.subr.bf16.mxu0 0
        %1743 = vmatpush1.bf16.msra.mxu0 0
        %1744 = vmatprep.subr.bf16.mxu0 0
        %1745 = vmatpush1.bf16.msra.mxu0 0
        %1746 = vmatprep.subr.bf16.mxu0 0
        %1747 = vmatpush1.bf16.msra.mxu0 0
        %1748 = vmatprep.subr.bf16.mxu0 0
        %1749 = vmatpush1.bf16.msra.mxu0 0
        %1750 = vmatprep.subr.bf16.mxu0 0
        %1751 = vmatpush1.bf16.msra.mxu0 0
        %1752 = vmatprep.mubr.bf16.mxu0 0
        %1753 = vmatmul.mubr.bf16.gmra.mrb[0].mxu0 %v1718
        %v1754 = vpop.f32.mrb[0].mxu0
        %v1755 = vadd.f32 %v1703, %v1754
        %v1756 = vpop.f32.mrb[0].mxu0
        %v1757 = vpop.f32.mrb[0].mxu0
        %v1758 = vpop.f32.mrb[0].mxu0
        %1759 = vdwg.mxu0
        %v1760 = vmul.f32 %v1755, 0.5
        %v1761 = vmul.f32 %v1755, 0.70710677
        %v1762 = verf.f32.pop %v1761
        %v1763 = vadd.f32 %v1762, 1.0
        %v1764 = vmul.f32 %v1760, %v1763
        %v1765 = vpack.c.bf16 %v1764, %v1764
        %v1766 = vld [vmem:[%s9] sm:$0xf]
        %v1767 = vld [vmem:[%s9 + $0x4] sm:$0xf]
        %v1768 = vld [vmem:[%s9 + $0x8] sm:$0xf]
        %v1769 = vld [vmem:[%s9 + $0xc] sm:$0xf]
        %v1770 = vld [vmem:[%s9 + $0x10] sm:$0xf]
        %v1771 = vld [vmem:[%s9 + $0x14] sm:$0xf]
        %v1772 = vld [vmem:[%s9 + $0x18] sm:$0xf]
        %v1773 = vld [vmem:[%s9 + $0x1c] sm:$0xf]
        %v1774 = vld [vmem:[%s9 + $0x20] sm:$0xf]
        %v1775 = vld [vmem:[%s9 + $0x24] sm:$0xf]
        %v1776 = vld [vmem:[%s9 + $0x28] sm:$0xf]
        %v1777 = vld [vmem:[%s9 + $0x2c] sm:$0xf]
        %v1778 = vld [vmem:[%s9 + $0x30] sm:$0xf]
        %v1779 = vld [vmem:[%s9 + $0x34] sm:$0xf]
        %v1780 = vld [vmem:[%s9 + $0x38] sm:$0xf]
        %v1781 = vld [vmem:[%s9 + $0x3c] sm:$0xf]
        %v1782 = vld [vmem:[%s10] sm:$0x1]
        %v1784 = vlaneseq
        %v1785 = vshrl.u32 %v1784, 7
        %v1786 = vsub.s32 0, %v1785
        %v1787 = vrot.slane %v1782, %v1786
        %v1805 = vunpack.c.l.b16 %v1766
        %v1806 = vunpack.c.l.b16 %v1767
        %v1807 = vunpack.c.l.b16 %v1768
        %v1808 = vunpack.c.l.b16 %v1769
        %v1809 = vunpack.c.l.b16 %v1770
        %v1810 = vunpack.c.l.b16 %v1771
        %v1811 = vunpack.c.l.b16 %v1772
        %v1812 = vunpack.c.l.b16 %v1773
        %v1813 = vunpack.c.l.b16 %v1774
        %v1814 = vunpack.c.l.b16 %v1775
        %v1815 = vunpack.c.l.b16 %v1776
        %v1816 = vunpack.c.l.b16 %v1777
        %v1817 = vunpack.c.l.b16 %v1778
        %v1818 = vunpack.c.l.b16 %v1779
        %v1819 = vunpack.c.l.b16 %v1780
        %v1820 = vunpack.c.l.b16 %v1781
        %v1821 = vpack.c.b16 %v1806, %v1805
        %v1822 = vpack.c.b16 %v1808, %v1807
        %v1823 = vpack.c.b16 %v1810, %v1809
        %v1824 = vpack.c.b16 %v1812, %v1811
        %v1825 = vpack.c.b16 %v1814, %v1813
        %v1826 = vpack.c.b16 %v1816, %v1815
        %v1827 = vpack.c.b16 %v1818, %v1817
        %v1828 = vpack.c.b16 %v1820, %v1819
        %1837 = vmatprep.subr.bf16.mxu0 0
        %1838 = vmatpush1.bf16.msra.mxu0 %v1821
        %1839 = vmatprep.subr.bf16.mxu0 0
        %1840 = vmatpush1.bf16.msra.mxu0 %v1822
        %1841 = vmatprep.subr.bf16.mxu0 0
        %1842 = vmatpush1.bf16.msra.mxu0 %v1823
        %1843 = vmatprep.subr.bf16.mxu0 0
        %1844 = vmatpush1.bf16.msra.mxu0 %v1824
        %1845 = vmatprep.subr.bf16.mxu0 0
        %1846 = vmatpush1.bf16.msra.mxu0 %v1825
        %1847 = vmatprep.subr.bf16.mxu0 0
        %1848 = vmatpush1.bf16.msra.mxu0 %v1826
        %1849 = vmatprep.subr.bf16.mxu0 0
        %1850 = vmatpush1.bf16.msra.mxu0 %v1827
        %1851 = vmatprep.subr.bf16.mxu0 0
        %1852 = vmatpush1.bf16.msra.mxu0 %v1828
        %1853 = vmatprep.subr.bf16.mxu0 0
        %1854 = vmatpush1.bf16.msra.mxu0 0
        %1855 = vmatprep.subr.bf16.mxu0 0
        %1856 = vmatpush1.bf16.msra.mxu0 0
        %1857 = vmatprep.subr.bf16.mxu0 0
        %1858 = vmatpush1.bf16.msra.mxu0 0
        %1859 = vmatprep.subr.bf16.mxu0 0
        %1860 = vmatpush1.bf16.msra.mxu0 0
        %1861 = vmatprep.subr.bf16.mxu0 0
        %1862 = vmatpush1.bf16.msra.mxu0 0
        %1863 = vmatprep.subr.bf16.mxu0 0
        %1864 = vmatpush1.bf16.msra.mxu0 0
        %1865 = vmatprep.subr.bf16.mxu0 0
        %1866 = vmatpush1.bf16.msra.mxu0 0
        %1867 = vmatprep.subr.bf16.mxu0 0
        %1868 = vmatpush1.bf16.msra.mxu0 0
        %1869 = vmatprep.mubr.bf16.mxu0 0
        %1870 = vmatmul.mubr.bf16.gmra.mrb[0].mxu0 %v1765
        %v1871 = vpop.f32.mrb[0].mxu0
        %v1872 = vadd.f32 %v1787, %v1871
        %v1873 = vpop.f32.mrb[0].mxu0
        %v1874 = vpop.f32.mrb[0].mxu0
        %v1875 = vpop.f32.mrb[0].mxu0
        %1876 = vdwg.mxu0
        %v1877 = vadd.f32 %v1684, %v1872
        %1878 = vst.msk [vmem:[%s390] sm:$0xff] %vm398, %v1877
        %s1879 = sand.u32 %s270, 1
        %s1880 = scalar_lea.sflag [#allocation4], %s1879
        %s1881 = sand.u32 %s270, 1
        %s1882 = smul.addr %s1881, 8
        %s1883 = scalar_lea.vmem [#allocation5], %s1882
        // Predicated region
        $region69: #{tpu_custom_call.1} parent=63 // pred_check
          %p1884 = pneg %p280
        $region70: #{tpu_custom_call.1} parent=63 // pred_check_branch
          %1886 = sbr.rel (%p1884) target = $region72
        $region71: #{tpu_custom_call.1} parent=63 // pred_region
          %s1888 = ssub.s32 128, 128
          %1889 = vsyncadd %s1880, %s1888
          %s1890 = smul.addr %s26, 128
          %s1891 = scalar_lea.hbm %s11, %s1890
          %s1893 = sshll.u32 %s1883, 4
          %s1894 = int_to_ptr.vmem [resolvable:$true] %s1893
          %1896 = dma.vmem_to_hbm [thread:$0]  %s1894, 128, %s1891, %s1880
        $region72: #{tpu_custom_call.1} parent=63 // pred_fallthru
          _
      $region64: #{tpu_custom_call.1} parent=5 // pred_fallthru
        _
      %p1897 = scmp.le.s32.totalorder 2, %s21
      // Predicated region
      $region73: #{tpu_custom_call.1} parent=5 // pred_check
        %p1898 = pneg %p1897
      $region74: #{tpu_custom_call.1} parent=5 // pred_check_branch
        %1900 = sbr.rel (%p1898) target = $region76
      $region75: #{tpu_custom_call.1} parent=5 // pred_region
        %s1901 = ssub.s32 %s21, 2
        // Predicated region
        $region77: #{tpu_custom_call.1} parent=75 // pred_check
          %p1902 = pneg %p286
        $region78: #{tpu_custom_call.1} parent=75 // pred_check_branch
          %1904 = sbr.rel (%p1902) target = $region80
        $region79: #{tpu_custom_call.1} parent=75 // pred_region
          %s1905 = sand.u32 %s271, 1
          %s1906 = scalar_lea.sflag [#allocation4], %s1905
          %s1907 = sand.u32 %s271, 1
          %s1908 = smul.addr %s1907, 8
          %s1909 = scalar_lea.vmem [#allocation5], %s1908
          %1910 = dma.done %s1906, 128
        $region80: #{tpu_custom_call.1} parent=75 // pred_fallthru
          _
      $region76: #{tpu_custom_call.1} parent=5 // pred_fallthru
        _
    $region6: #{tpu_custom_call.1} parent=1 // loop_footer
      %s25 = sadd.s32 1, %s21
    $region7: #{tpu_custom_call.1} parent=1 // loop_footer_branch
      %20 = sbr.rel target = $region3
    $region8: #{tpu_custom_call.1} parent=1 // loop_exit
      _
    %1911 = vsyncpa [#allocation3], 1
    %s1912 = scalar_lea.sflag [#allocation3], 1
    %1913 = vsyncpa %s1912, 1
    %1914 = vsyncpa [#allocation4], 1
    %s1915 = scalar_lea.sflag [#allocation4], 1
    %1916 = vsyncpa %s1915, 1

</llo_original>
